<compile_context>
chip_gen: v7x
topology: tpu7x:2x2x1
jax: 0.10.0
libtpu: 0.0.40
codegen_flags: <defaults>
</compile_context>

<pallas_src>
import functools

import jax
import jax.numpy as jnp
from jax import lax
from jax.experimental import pallas as pl
from jax.experimental.pallas import tpu as pltpu

_PARAM_WIDTH = 128          # lane width of the packed parameter buffer
_VMEM_SPEC = pl.BlockSpec(memory_space=pltpu.MemorySpace.VMEM)


def _rup(x, m):
    return (x + m - 1) // m * m


def _data_width(state_dim, act_dim, z_dim):
    return _rup(max(state_dim, act_dim, z_dim), 8)


def _param_layout(state_dim, act_dim, hidden, z_dim):
    """Row offsets of each weight/bias segment inside the packed (rows, 128) buffer."""
    dw = _data_width(state_dim, act_dim, z_dim)
    h8 = _rup(hidden, 8)
    z8 = _rup(z_dim, 8)
    off, r = {}, 0
    for name, rows in (("w1", dw), ("w2", h8), ("we_ih", dw), ("we_hh", h8),
                       ("we_proj", h8), ("wd_ih", z8), ("wd_hh", h8),
                       ("wd_proj", h8), ("bias", 8)):
        off[name] = r
        r += rows
    return off, r, dw


# -----------------------------------------------------------------------------
# LSTM cell (PyTorch gate order i, f, g, o; combined bias b_ih + b_hh)
# -----------------------------------------------------------------------------
def _lstm_cell(gates, c, hidden):
    # One full-tile sigmoid (single EUP push) + one tanh on the g slice.
    sig = jax.nn.sigmoid(gates)
    i = sig[:, 0 * hidden:1 * hidden]
    f = sig[:, 1 * hidden:2 * hidden]
    g = jnp.tanh(gates[:, 2 * hidden:3 * hidden])
    o = sig[:, 3 * hidden:4 * hidden]
    c_new = f * c + i * g
    h_new = o * jnp.tanh(c_new)
    return h_new, c_new


# -----------------------------------------------------------------------------
# Fused SkillPrior forward kernel (2 inputs, 2 outputs, no scratch)
# -----------------------------------------------------------------------------
def skill_prior_kernel(data_ref, params_ref, small_ref, x_ref,
                       *, off, hidden, z_dim, H, B, dw):
    f32 = jnp.float32
    bf16 = jnp.bfloat16

    # ---- static slices of the packed buffers (all 8-row aligned, full 128 lanes) ----
    w1 = params_ref[off["w1"]:off["w1"] + dw, :]                 # (dw, 128)
    w2 = params_ref[off["w2"]:off["w2"] + hidden, :]             # (hidden, 128)
    we_ih = params_ref[off["we_ih"]:off["we_ih"] + dw, :]        # (dw, 128)
    we_hh = params_ref[off["we_hh"]:off["we_hh"] + hidden, :]    # (hidden, 128)
    we_proj = params_ref[off["we_proj"]:off["we_proj"] + hidden, :]
    wd_ih = params_ref[off["wd_ih"]:off["wd_ih"] + z_dim, :]     # (z_dim, 128)
    wd_hh = params_ref[off["wd_hh"]:off["wd_hh"] + hidden, :]
    wd_proj = params_ref[off["wd_proj"]:off["wd_proj"] + hidden, :]
    biases = params_ref[off["bias"]:off["bias"] + 8, :]          # (8, 128)
    b1, b2 = biases[0:1, :], biases[1:2, :]
    be, be_proj = biases[2:3, :], biases[3:4, :]
    bd, bd_proj = biases[4:5, :], biases[5:6, :]

    states = data_ref[0:B, :]                                    # (B, dw)
    actions = data_ref[B:B + H * B, :]                           # (H*B, dw) zero-padded cols
    eps = data_ref[(H + 1) * B:(H + 2) * B, :][:, :z_dim]        # (B, z_dim)

    # ---------------- states encoder: SkillPrior.encode(states) ----------------
    # All weight columns beyond their real width are zero, so padded lanes stay exact.
    h1 = jnp.tanh(jnp.dot(states, w1, preferred_element_type=f32) + b1)   # (B, 128)
    zs = jnp.dot(h1[:, :hidden], w2, preferred_element_type=f32) + b2     # (B, 128)
    zs_mean = zs[:, :z_dim]
    zs_std = jax.nn.softplus(zs[:, z_dim:2 * z_dim])

    # ---------------- actions encoder: EncoderSeq.encode(actions) --------------
    # Hoisted input projection (one matmul for all H steps), f32.
    xg_all = jnp.dot(actions, we_ih, preferred_element_type=f32) + be     # (H*B, 128)
    we_hh_bf = we_hh.astype(bf16)      # bf16 operands for the serial-chain matmul, f32 acc
    h = jnp.zeros((B, hidden), f32)
    c = jnp.zeros((B, hidden), f32)
    for t in range(H):                 # H static -> fully unrolled, single basic block
        gates = xg_all[t * B:(t + 1) * B, :] + jnp.dot(
            h.astype(bf16), we_hh_bf, preferred_element_type=f32)
        h, c = _lstm_cell(gates, c, hidden)
    proj = jnp.dot(h, we_proj, preferred_element_type=f32) + be_proj      # (B, 128)
    z_mean = proj[:, :z_dim]
    z_std = jax.nn.softplus(proj[:, z_dim:2 * z_dim])

    # ---------------- rsample: z = mu + std * eps -------------------------------
    z = z_mean + z_std * eps

    # ---------------- actions decoder: DecoderSeq(z) ---------------------------
    # Same z at every step (repeat_interleave) -> input projection hoisted.
    xg_dec = jnp.dot(z, wd_ih, preferred_element_type=f32) + bd           # (B, 128)
    wd_hh_bf = wd_hh.astype(bf16)
    h = jnp.zeros((B, hidden), f32)
    c = jnp.zeros((B, hidden), f32)
    hs = []
    for t in range(H):                 # fully unrolled; h_t stay in registers (no scratch)
        gates = xg_dec + jnp.dot(h.astype(bf16), wd_hh_bf, preferred_element_type=f32)
        h, c = _lstm_cell(gates, c, hidden)
        hs.append(h)
    hs_all = jnp.concatenate(hs, axis=0)                                   # (H*B, hidden)
    # Hoisted, lane-dense output projection (wd_proj zero-padded to 128 cols at init):
    x_ref[...] = jnp.tanh(jnp.dot(hs_all, wd_proj, preferred_element_type=f32) + bd_proj)

    # Single merged small output: [z_mean | z_std | zs_mean | zs_std | z]
    small_ref[...] = jnp.concatenate([z_mean, z_std, zs_mean, zs_std, z], axis=1)


# -----------------------------------------------------------------------------
# Jitted wrapper: one XLA dispatch for data packing + kernel + output unpacking.
# -----------------------------------------------------------------------------
def _pad_cols(x, width):
    pad = width - x.shape[1]
    return x if pad == 0 else jnp.pad(x, ((0, 0), (0, pad)))


@functools.partial(jax.jit, static_argnames=("hidden", "z_dim", "H"))
def skill_prior_forward(packed_params, states, actions, sample_key, *, hidden, z_dim, H):
    """Mirrors SkillPrior.forward(states, actions).

    Normal distributions are represented as (mean, std) tuples; q_z.rsample() is
    mean + std * eps with eps ~ N(0, 1) sampled here and consumed in-kernel.
    """
    B, H_a, act_dim = actions.shape
    assert H_a == H
    state_dim = states.shape[1]
    off, total_rows, dw = _param_layout(state_dim, act_dim, hidden, z_dim)
    assert packed_params.shape == (total_rows, _PARAM_WIDTH)
    # B == 8 keeps all packed-data row boundaries (8,128)-tile aligned.

    actions_tm = jnp.transpose(actions, (1, 0, 2)).reshape(H * B, act_dim)   # time-major
    eps = jax.random.normal(sample_key, (B, z_dim), jnp.float32)
    data = jnp.concatenate([_pad_cols(states, dw),
                            _pad_cols(actions_tm, dw),
                            _pad_cols(eps, dw)], axis=0)                     # ((H+2)*B, dw)

    kernel = functools.partial(skill_prior_kernel, off=off, hidden=hidden,
                               z_dim=z_dim, H=H, B=B, dw=dw)
    out_shapes = (
        jax.ShapeDtypeStruct((B, 5 * z_dim), jnp.float32),        # merged small outputs
        jax.ShapeDtypeStruct((H * B, _PARAM_WIDTH), jnp.float32), # lane-dense decoded actions
    )
    small, x_wide = pl.pallas_call(
        kernel,
        out_shape=out_shapes,
        in_specs=[_VMEM_SPEC, _VMEM_SPEC],
        out_specs=(_VMEM_SPEC, _VMEM_SPEC),
    )(data, packed_params)

    z_mean = small[:, 0 * z_dim:1 * z_dim]
    z_std = small[:, 1 * z_dim:2 * z_dim]
    zs_mean = small[:, 2 * z_dim:3 * z_dim]
    zs_std = small[:, 3 * z_dim:4 * z_dim]
    z = small[:, 4 * z_dim:5 * z_dim]
    x_ = jnp.transpose(x_wide[:, :2].reshape(H, B, 2), (1, 0, 2))   # back to (B, H, 2)

    q_z = (z_mean, z_std)
    p_z = (jnp.zeros_like(z_mean), jnp.ones_like(z_std))
    pa_z = (zs_mean, zs_std)
    return (z_mean, z_std, zs_mean, zs_std), (q_z, p_z, pa_z), z, x_


# -----------------------------------------------------------------------------
# Deterministic parameter init (PyTorch-style uniform(-1/sqrt(fan), 1/sqrt(fan))).
# Weights stored PRE-TRANSPOSED (x @ W^T layout), biases as (1, N) rows.
# -----------------------------------------------------------------------------
def _uniform(key, shape, bound):
    return jax.random.uniform(key, shape, jnp.float32, -bound, bound)


def init_lstm_block(key, input_size, hidden, proj_out):
    k = 1.0 / (hidden ** 0.5)
    ks = jax.random.split(key, 6)
    return {
        "w_ih_t": _uniform(ks[0], (4 * hidden, input_size), k).T,     # (in, 4h)
        "w_hh_t": _uniform(ks[1], (4 * hidden, hidden), k).T,         # (h, 4h)
        # b = b_ih + b_hh (they always appear summed)
        "b": (_uniform(ks[2], (4 * hidden,), k)
              + _uniform(ks[3], (4 * hidden,), k)).reshape(1, -1),
        "w_proj_t": _uniform(ks[4], (proj_out, hidden), k).T,         # (h, proj_out)
        "b_proj": _uniform(ks[5], (proj_out,), k).reshape(1, -1),
    }


def init_states_encoder(key, state_dim, hidden, z_dim):
    k1 = 1.0 / (state_dim ** 0.5)
    k2 = 1.0 / (hidden ** 0.5)
    ks = jax.random.split(key, 4)
    return {
        "w1_t": _uniform(ks[0], (hidden, state_dim), k1).T,           # (state, h)
        "b1": _uniform(ks[1], (hidden,), k1).reshape(1, -1),
        "w2_t": _uniform(ks[2], (2 * z_dim, hidden), k2).T,           # (h, 2z)
        "b2": _uniform(ks[3], (2 * z_dim,), k2).reshape(1, -1),
    }


def pack_skill_prior_params(params, state_dim, act_dim, hidden, z_dim):
    """One-time packing of all module parameters into a single (rows, 128) f32 buffer."""
    assert 4 * hidden <= _PARAM_WIDTH and 2 * z_dim <= _PARAM_WIDTH and hidden <= _PARAM_WIDTH
    off, total_rows, dw = _param_layout(state_dim, act_dim, hidden, z_dim)
    assert max(state_dim, act_dim, z_dim) <= dw
    ps, pe, pd = params["senc"], params["aenc"], params["adec"]
    buf = jnp.zeros((total_rows, _PARAM_WIDTH), jnp.float32)
    buf = buf.at[off["w1"]:off["w1"] + state_dim, :hidden].set(ps["w1_t"])
    buf = buf.at[off["w2"]:off["w2"] + hidden, :2 * z_dim].set(ps["w2_t"])
    buf = buf.at[off["we_ih"]:off["we_ih"] + act_dim, :4 * hidden].set(pe["w_ih_t"])
    buf = buf.at[off["we_hh"]:off["we_hh"] + hidden, :4 * hidden].set(pe["w_hh_t"])
    buf = buf.at[off["we_proj"]:off["we_proj"] + hidden, :2 * z_dim].set(pe["w_proj_t"])
    buf = buf.at[off["wd_ih"]:off["wd_ih"] + z_dim, :4 * hidden].set(pd["w_ih_t"])
    buf = buf.at[off["wd_hh"]:off["wd_hh"] + hidden, :4 * hidden].set(pd["w_hh_t"])
    buf = buf.at[off["wd_proj"]:off["wd_proj"] + hidden, :2].set(pd["w_proj_t"])
    b = off["bias"]
    buf = buf.at[b + 0, :hidden].set(ps["b1"][0])
    buf = buf.at[b + 1, :2 * z_dim].set(ps["b2"][0])
    buf = buf.at[b + 2, :4 * hidden].set(pe["b"][0])
    buf = buf.at[b + 3, :2 * z_dim].set(pe["b_proj"][0])
    buf = buf.at[b + 4, :4 * hidden].set(pd["b"][0])
    buf = buf.at[b + 5, :2].set(pd["b_proj"][0])
    return buf


# -----------------------------------------------------------------------------
# Pure-JAX references.
#   recurrent_bf16=True  : matches the kernel's numerics (bf16 operands on h@W_hh only).
#   recurrent_bf16=False : pure f32 == PyTorch-module semantics (loose sanity check).
# -----------------------------------------------------------------------------
def _ref_lstm(x_bhf, w_ih_t, w_hh_t, b, hidden, recurrent_bf16):
    B = x_bhf.shape[0]
    w_hh = w_hh_t.astype(jnp.bfloat16) if recurrent_bf16 else w_hh_t
    xg = jnp.einsum("bhf,fg->bhg", x_bhf, w_ih_t) + b          # hoisted input proj (f32)

    def step(carry, xg_t):
        h, c = carry
        hh = h.astype(jnp.bfloat16) if recurrent_bf16 else h
        gates = xg_t + jnp.dot(hh, w_hh, preferred_element_type=jnp.float32)
        h_new, c_new = _lstm_cell(gates, c, hidden)
        return (h_new, c_new), h_new

    (h, _), hs = lax.scan(step,
                          (jnp.zeros((B, hidden)), jnp.zeros((B, hidden))),
                          jnp.transpose(xg, (1, 0, 2)))
    return h, jnp.transpose(hs, (1, 0, 2))


def _ref_forward(params, states, actions, sample_key, H, hidden, z_dim, recurrent_bf16):
    p = params["senc"]
    h = jnp.tanh(states @ p["w1_t"] + p["b1"])
    out = h @ p["w2_t"] + p["b2"]
    zs_mean, zs_std = out[:, :z_dim], jax.nn.softplus(out[:, z_dim:])

    p = params["aenc"]
    h_last, _ = _ref_lstm(actions, p["w_ih_t"], p["w_hh_t"], p["b"], hidden, recurrent_bf16)
    proj = h_last @ p["w_proj_t"] + p["b_proj"]
    z_mean, z_std = proj[:, :z_dim], jax.nn.softplus(proj[:, z_dim:])

    eps = jax.random.normal(sample_key, z_mean.shape, jnp.float32)
    z = z_mean + z_std * eps

    p = params["adec"]
    z_rep = jnp.repeat(z[:, None, :], H, axis=1)
    _, hs = _ref_lstm(z_rep, p["w_ih_t"], p["w_hh_t"], p["b"], hidden, recurrent_bf16)
    x_ = jnp.tanh(hs @ p["w_proj_t"] + p["b_proj"])
    return zs_mean, zs_std, z_mean, z_std, z, x_


# -----------------------------------------------------------------------------
if __name__ == "__main__":
    # B=8 fills all 8 f32 sublanes and keeps packed-row boundaries tile-aligned.
    B, H, hidden, z_dim, state_dim, action_dim = 8, 8, 32, 4, 16, 2

    root = jax.random.PRNGKey(0)
    k_senc, k_aenc, k_adec, k_states, k_actions, k_sample = jax.random.split(root, 6)

    params = {
        "senc": init_states_encoder(k_senc, state_dim, hidden, z_dim),
        "aenc": init_lstm_block(k_aenc, action_dim, hidden, 2 * z_dim),   # EncoderSeq
        "adec": init_lstm_block(k_adec, z_dim, hidden, 2),                # DecoderSeq
    }
    packed = pack_skill_prior_params(params, state_dim, action_dim, hidden, z_dim)

    states = jax.random.normal(k_states, (B, state_dim), jnp.float32)
    actions = jax.random.normal(k_actions, (B, H, action_dim), jnp.float32)

    (dists, (q_z, p_z, pa_z), z, x_) = skill_prior_forward(
        packed, states, actions, k_sample, hidden=hidden, z_dim=z_dim, H=H)
    jax.block_until_ready((dists, q_z, p_z, pa_z, z, x_))

    z_mean, z_std, zs_mean, zs_std = dists
    assert z_mean.shape == (B, z_dim) and zs_std.shape == (B, z_dim)
    assert z.shape == (B, z_dim) and x_.shape == (B, H, 2)

    got = (zs_mean, zs_std, z_mean, z_std, z, x_)

    # Strict check against the numerics-matched reference (bf16 operands on h@W_hh only).
    ref_m = _ref_forward(params, states, actions, k_sample, H, hidden, z_dim, True)
    for g, w in zip(got, ref_m):
        assert jnp.allclose(g, w, atol=2e-4, rtol=2e-4), "mismatch vs matched reference"

    # Loose sanity check against the pure-f32 (PyTorch-semantics) reference: the bf16
    # recurrent-operand rounding compounded over H steps stays within a few 1e-3.
    ref_f = _ref_forward(params, states, actions, k_sample, H, hidden, z_dim, False)
    for g, w in zip(got, ref_f):
        assert jnp.allclose(g, w, atol=5e-2, rtol=5e-2), "mismatch vs f32 reference"

    print("KERNEL_OK")
</pallas_src>

<mosaic_0001>
module attributes {stable_mosaic.version = 11 : i64} {
  func.func @skill_prior_kernel(%arg0: memref<80x16xf32, #tpu.memory_space<vmem>>, %arg1: memref<208x128xf32, #tpu.memory_space<vmem>>, %arg2: memref<8x20xf32, #tpu.memory_space<vmem>>, %arg3: memref<64x128xf32, #tpu.memory_space<vmem>>) attributes {dimension_semantics = [], scalar_prefetch = 0 : i64, scratch_operands = 0 : i64, tpu.core_type = #tpu.core_type<tc>} {
    %c0 = arith.constant 0 : index
    %c0_0 = arith.constant 0 : index
    %0 = vector.load %arg1[%c0, %c0_0] : memref<208x128xf32, #tpu.memory_space<vmem>>, vector<16x128xf32>
    %c16 = arith.constant 16 : index
    %c0_1 = arith.constant 0 : index
    %1 = vector.load %arg1[%c16, %c0_1] : memref<208x128xf32, #tpu.memory_space<vmem>>, vector<32x128xf32>
    %c48 = arith.constant 48 : index
    %c0_2 = arith.constant 0 : index
    %2 = vector.load %arg1[%c48, %c0_2] : memref<208x128xf32, #tpu.memory_space<vmem>>, vector<16x128xf32>
    %c64 = arith.constant 64 : index
    %c0_3 = arith.constant 0 : index
    %3 = vector.load %arg1[%c64, %c0_3] : memref<208x128xf32, #tpu.memory_space<vmem>>, vector<32x128xf32>
    %c96 = arith.constant 96 : index
    %c0_4 = arith.constant 0 : index
    %4 = vector.load %arg1[%c96, %c0_4] : memref<208x128xf32, #tpu.memory_space<vmem>>, vector<32x128xf32>
    %c128 = arith.constant 128 : index
    %c0_5 = arith.constant 0 : index
    %5 = vector.load %arg1[%c128, %c0_5] : memref<208x128xf32, #tpu.memory_space<vmem>>, vector<4x128xf32>
    %c136 = arith.constant 136 : index
    %c0_6 = arith.constant 0 : index
    %6 = vector.load %arg1[%c136, %c0_6] : memref<208x128xf32, #tpu.memory_space<vmem>>, vector<32x128xf32>
    %c168 = arith.constant 168 : index
    %c0_7 = arith.constant 0 : index
    %7 = vector.load %arg1[%c168, %c0_7] : memref<208x128xf32, #tpu.memory_space<vmem>>, vector<32x128xf32>
    %c200 = arith.constant 200 : index
    %c0_8 = arith.constant 0 : index
    %8 = vector.load %arg1[%c200, %c0_8] : memref<208x128xf32, #tpu.memory_space<vmem>>, vector<8x128xf32>
    %9 = vector.extract_strided_slice %8 {offsets = [0, 0], sizes = [1, 128], strides = [1, 1]} : vector<8x128xf32> to vector<1x128xf32>
    %10 = vector.extract_strided_slice %8 {offsets = [1, 0], sizes = [1, 128], strides = [1, 1]} : vector<8x128xf32> to vector<1x128xf32>
    %11 = vector.extract_strided_slice %8 {offsets = [2, 0], sizes = [1, 128], strides = [1, 1]} : vector<8x128xf32> to vector<1x128xf32>
    %12 = vector.extract_strided_slice %8 {offsets = [3, 0], sizes = [1, 128], strides = [1, 1]} : vector<8x128xf32> to vector<1x128xf32>
    %13 = vector.extract_strided_slice %8 {offsets = [4, 0], sizes = [1, 128], strides = [1, 1]} : vector<8x128xf32> to vector<1x128xf32>
    %14 = vector.extract_strided_slice %8 {offsets = [5, 0], sizes = [1, 128], strides = [1, 1]} : vector<8x128xf32> to vector<1x128xf32>
    %c0_9 = arith.constant 0 : index
    %c0_10 = arith.constant 0 : index
    %15 = vector.load %arg0[%c0_9, %c0_10] : memref<80x16xf32, #tpu.memory_space<vmem>>, vector<8x16xf32>
    %c8 = arith.constant 8 : index
    %c0_11 = arith.constant 0 : index
    %16 = vector.load %arg0[%c8, %c0_11] : memref<80x16xf32, #tpu.memory_space<vmem>>, vector<64x16xf32>
    %c72 = arith.constant 72 : index
    %c0_12 = arith.constant 0 : index
    %17 = vector.load %arg0[%c72, %c0_12] : memref<80x16xf32, #tpu.memory_space<vmem>>, vector<8x16xf32>
    %18 = vector.extract_strided_slice %17 {offsets = [0, 0], sizes = [8, 4], strides = [1, 1]} : vector<8x16xf32> to vector<8x4xf32>
    %cst = arith.constant dense<0.000000e+00> : vector<8x128xf32>
    %19 = tpu.matmul %15, %0, %cst {dimension_numbers = #tpu.dot_dimension_numbers<[1], [0], [0], [1], [0, 0, 1, 1], [], []>} : vector<8x16xf32>, vector<16x128xf32>, vector<8x128xf32> -> vector<8x128xf32>
    %20 = vector.broadcast %9 : vector<1x128xf32> to vector<8x128xf32>
    %21 = arith.addf %19, %20 : vector<8x128xf32>
    %22 = math.tanh %21 : vector<8x128xf32>
    %23 = vector.extract_strided_slice %22 {offsets = [0, 0], sizes = [8, 32], strides = [1, 1]} : vector<8x128xf32> to vector<8x32xf32>
    %cst_13 = arith.constant dense<0.000000e+00> : vector<8x128xf32>
    %24 = tpu.matmul %23, %1, %cst_13 {dimension_numbers = #tpu.dot_dimension_numbers<[1], [0], [0], [1], [0, 0, 1, 1], [], []>} : vector<8x32xf32>, vector<32x128xf32>, vector<8x128xf32> -> vector<8x128xf32>
    %25 = vector.broadcast %10 : vector<1x128xf32> to vector<8x128xf32>
    %26 = arith.addf %24, %25 : vector<8x128xf32>
    %27 = vector.extract_strided_slice %26 {offsets = [0, 0], sizes = [8, 4], strides = [1, 1]} : vector<8x128xf32> to vector<8x4xf32>
    %28 = vector.extract_strided_slice %26 {offsets = [0, 4], sizes = [8, 4], strides = [1, 1]} : vector<8x128xf32> to vector<8x4xf32>
    %cst_14 = arith.constant 0.000000e+00 : f32
    %29 = vector.broadcast %cst_14 : f32 to vector<8x4xf32>
    %30 = arith.maximumf %28, %29 : vector<8x4xf32>
    %31 = vector.broadcast %cst_14 : f32 to vector<8x4xf32>
    %32 = arith.subf %28, %31 : vector<8x4xf32>
    %33 = arith.cmpf one, %32, %32 : vector<8x4xf32>
    %34 = vector.broadcast %cst_14 : f32 to vector<8x4xf32>
    %35 = arith.addf %28, %34 : vector<8x4xf32>
    %36 = math.absf %32 : vector<8x4xf32>
    %cst_15 = arith.constant 0.000000e+00 : f32
    %37 = vector.broadcast %cst_15 : f32 to vector<8x4xf32>
    %38 = arith.subf %37, %36 : vector<8x4xf32>
    %39 = math.exp %38 : vector<8x4xf32>
    %40 = math.log1p %39 : vector<8x4xf32>
    %41 = arith.addf %30, %40 : vector<8x4xf32>
    %42 = arith.select %33, %35, %41 : vector<8x4xi1>, vector<8x4xf32>
    %cst_16 = arith.constant dense<0.000000e+00> : vector<64x128xf32>
    %43 = tpu.matmul %16, %2, %cst_16 {dimension_numbers = #tpu.dot_dimension_numbers<[1], [0], [0], [1], [0, 0, 1, 1], [], []>} : vector<64x16xf32>, vector<16x128xf32>, vector<64x128xf32> -> vector<64x128xf32>
    %44 = vector.broadcast %11 : vector<1x128xf32> to vector<64x128xf32>
    %45 = arith.addf %43, %44 : vector<64x128xf32>
    %46 = arith.truncf %3 : vector<32x128xf32> to vector<32x128xbf16>
    %cst_17 = arith.constant 0.000000e+00 : f32
    %47 = vector.broadcast %cst_17 : f32 to vector<8x32xf32>
    %cst_18 = arith.constant 0.000000e+00 : f32
    %48 = vector.broadcast %cst_18 : f32 to vector<8x32xf32>
    %49 = vector.extract_strided_slice %45 {offsets = [0, 0], sizes = [8, 128], strides = [1, 1]} : vector<64x128xf32> to vector<8x128xf32>
    %50 = arith.truncf %47 : vector<8x32xf32> to vector<8x32xbf16>
    %cst_19 = arith.constant dense<0.000000e+00> : vector<8x128xf32>
    %51 = tpu.matmul %50, %46, %cst_19 {dimension_numbers = #tpu.dot_dimension_numbers<[1], [0], [0], [1], [0, 0, 1, 1], [], []>} : vector<8x32xbf16>, vector<32x128xbf16>, vector<8x128xf32> -> vector<8x128xf32>
    %52 = arith.addf %49, %51 : vector<8x128xf32>
    %53 = arith.negf %52 : vector<8x128xf32>
    %54 = math.exp %53 : vector<8x128xf32>
    %cst_20 = arith.constant 1.000000e+00 : f32
    %55 = vector.broadcast %cst_20 : f32 to vector<8x128xf32>
    %56 = arith.addf %55, %54 : vector<8x128xf32>
    %57 = arith.divf %55, %56 : vector<8x128xf32>
    %58 = vector.extract_strided_slice %57 {offsets = [0, 0], sizes = [8, 32], strides = [1, 1]} : vector<8x128xf32> to vector<8x32xf32>
    %59 = vector.extract_strided_slice %57 {offsets = [0, 32], sizes = [8, 32], strides = [1, 1]} : vector<8x128xf32> to vector<8x32xf32>
    %60 = vector.extract_strided_slice %52 {offsets = [0, 64], sizes = [8, 32], strides = [1, 1]} : vector<8x128xf32> to vector<8x32xf32>
    %61 = math.tanh %60 : vector<8x32xf32>
    %62 = vector.extract_strided_slice %57 {offsets = [0, 96], sizes = [8, 32], strides = [1, 1]} : vector<8x128xf32> to vector<8x32xf32>
    %63 = arith.mulf %59, %48 : vector<8x32xf32>
    %64 = arith.mulf %58, %61 : vector<8x32xf32>
    %65 = arith.addf %63, %64 : vector<8x32xf32>
    %66 = math.tanh %65 : vector<8x32xf32>
    %67 = arith.mulf %62, %66 : vector<8x32xf32>
    %68 = vector.extract_strided_slice %45 {offsets = [8, 0], sizes = [8, 128], strides = [1, 1]} : vector<64x128xf32> to vector<8x128xf32>
    %69 = arith.truncf %67 : vector<8x32xf32> to vector<8x32xbf16>
    %cst_21 = arith.constant dense<0.000000e+00> : vector<8x128xf32>
    %70 = tpu.matmul %69, %46, %cst_21 {dimension_numbers = #tpu.dot_dimension_numbers<[1], [0], [0], [1], [0, 0, 1, 1], [], []>} : vector<8x32xbf16>, vector<32x128xbf16>, vector<8x128xf32> -> vector<8x128xf32>
    %71 = arith.addf %68, %70 : vector<8x128xf32>
    %72 = arith.negf %71 : vector<8x128xf32>
    %73 = math.exp %72 : vector<8x128xf32>
    %cst_22 = arith.constant 1.000000e+00 : f32
    %74 = vector.broadcast %cst_22 : f32 to vector<8x128xf32>
    %75 = arith.addf %74, %73 : vector<8x128xf32>
    %76 = arith.divf %74, %75 : vector<8x128xf32>
    %77 = vector.extract_strided_slice %76 {offsets = [0, 0], sizes = [8, 32], strides = [1, 1]} : vector<8x128xf32> to vector<8x32xf32>
    %78 = vector.extract_strided_slice %76 {offsets = [0, 32], sizes = [8, 32], strides = [1, 1]} : vector<8x128xf32> to vector<8x32xf32>
    %79 = vector.extract_strided_slice %71 {offsets = [0, 64], sizes = [8, 32], strides = [1, 1]} : vector<8x128xf32> to vector<8x32xf32>
    %80 = math.tanh %79 : vector<8x32xf32>
    %81 = vector.extract_strided_slice %76 {offsets = [0, 96], sizes = [8, 32], strides = [1, 1]} : vector<8x128xf32> to vector<8x32xf32>
    %82 = arith.mulf %78, %65 : vector<8x32xf32>
    %83 = arith.mulf %77, %80 : vector<8x32xf32>
    %84 = arith.addf %82, %83 : vector<8x32xf32>
    %85 = math.tanh %84 : vector<8x32xf32>
    %86 = arith.mulf %81, %85 : vector<8x32xf32>
    %87 = vector.extract_strided_slice %45 {offsets = [16, 0], sizes = [8, 128], strides = [1, 1]} : vector<64x128xf32> to vector<8x128xf32>
    %88 = arith.truncf %86 : vector<8x32xf32> to vector<8x32xbf16>
    %cst_23 = arith.constant dense<0.000000e+00> : vector<8x128xf32>
    %89 = tpu.matmul %88, %46, %cst_23 {dimension_numbers = #tpu.dot_dimension_numbers<[1], [0], [0], [1], [0, 0, 1, 1], [], []>} : vector<8x32xbf16>, vector<32x128xbf16>, vector<8x128xf32> -> vector<8x128xf32>
    %90 = arith.addf %87, %89 : vector<8x128xf32>
    %91 = arith.negf %90 : vector<8x128xf32>
    %92 = math.exp %91 : vector<8x128xf32>
    %cst_24 = arith.constant 1.000000e+00 : f32
    %93 = vector.broadcast %cst_24 : f32 to vector<8x128xf32>
    %94 = arith.addf %93, %92 : vector<8x128xf32>
    %95 = arith.divf %93, %94 : vector<8x128xf32>
    %96 = vector.extract_strided_slice %95 {offsets = [0, 0], sizes = [8, 32], strides = [1, 1]} : vector<8x128xf32> to vector<8x32xf32>
    %97 = vector.extract_strided_slice %95 {offsets = [0, 32], sizes = [8, 32], strides = [1, 1]} : vector<8x128xf32> to vector<8x32xf32>
    %98 = vector.extract_strided_slice %90 {offsets = [0, 64], sizes = [8, 32], strides = [1, 1]} : vector<8x128xf32> to vector<8x32xf32>
    %99 = math.tanh %98 : vector<8x32xf32>
    %100 = vector.extract_strided_slice %95 {offsets = [0, 96], sizes = [8, 32], strides = [1, 1]} : vector<8x128xf32> to vector<8x32xf32>
    %101 = arith.mulf %97, %84 : vector<8x32xf32>
    %102 = arith.mulf %96, %99 : vector<8x32xf32>
    %103 = arith.addf %101, %102 : vector<8x32xf32>
    %104 = math.tanh %103 : vector<8x32xf32>
    %105 = arith.mulf %100, %104 : vector<8x32xf32>
    %106 = vector.extract_strided_slice %45 {offsets = [24, 0], sizes = [8, 128], strides = [1, 1]} : vector<64x128xf32> to vector<8x128xf32>
    %107 = arith.truncf %105 : vector<8x32xf32> to vector<8x32xbf16>
    %cst_25 = arith.constant dense<0.000000e+00> : vector<8x128xf32>
    %108 = tpu.matmul %107, %46, %cst_25 {dimension_numbers = #tpu.dot_dimension_numbers<[1], [0], [0], [1], [0, 0, 1, 1], [], []>} : vector<8x32xbf16>, vector<32x128xbf16>, vector<8x128xf32> -> vector<8x128xf32>
    %109 = arith.addf %106, %108 : vector<8x128xf32>
    %110 = arith.negf %109 : vector<8x128xf32>
    %111 = math.exp %110 : vector<8x128xf32>
    %cst_26 = arith.constant 1.000000e+00 : f32
    %112 = vector.broadcast %cst_26 : f32 to vector<8x128xf32>
    %113 = arith.addf %112, %111 : vector<8x128xf32>
    %114 = arith.divf %112, %113 : vector<8x128xf32>
    %115 = vector.extract_strided_slice %114 {offsets = [0, 0], sizes = [8, 32], strides = [1, 1]} : vector<8x128xf32> to vector<8x32xf32>
    %116 = vector.extract_strided_slice %114 {offsets = [0, 32], sizes = [8, 32], strides = [1, 1]} : vector<8x128xf32> to vector<8x32xf32>
    %117 = vector.extract_strided_slice %109 {offsets = [0, 64], sizes = [8, 32], strides = [1, 1]} : vector<8x128xf32> to vector<8x32xf32>
    %118 = math.tanh %117 : vector<8x32xf32>
    %119 = vector.extract_strided_slice %114 {offsets = [0, 96], sizes = [8, 32], strides = [1, 1]} : vector<8x128xf32> to vector<8x32xf32>
    %120 = arith.mulf %116, %103 : vector<8x32xf32>
    %121 = arith.mulf %115, %118 : vector<8x32xf32>
    %122 = arith.addf %120, %121 : vector<8x32xf32>
    %123 = math.tanh %122 : vector<8x32xf32>
    %124 = arith.mulf %119, %123 : vector<8x32xf32>
    %125 = vector.extract_strided_slice %45 {offsets = [32, 0], sizes = [8, 128], strides = [1, 1]} : vector<64x128xf32> to vector<8x128xf32>
    %126 = arith.truncf %124 : vector<8x32xf32> to vector<8x32xbf16>
    %cst_27 = arith.constant dense<0.000000e+00> : vector<8x128xf32>
    %127 = tpu.matmul %126, %46, %cst_27 {dimension_numbers = #tpu.dot_dimension_numbers<[1], [0], [0], [1], [0, 0, 1, 1], [], []>} : vector<8x32xbf16>, vector<32x128xbf16>, vector<8x128xf32> -> vector<8x128xf32>
    %128 = arith.addf %125, %127 : vector<8x128xf32>
    %129 = arith.negf %128 : vector<8x128xf32>
    %130 = math.exp %129 : vector<8x128xf32>
    %cst_28 = arith.constant 1.000000e+00 : f32
    %131 = vector.broadcast %cst_28 : f32 to vector<8x128xf32>
    %132 = arith.addf %131, %130 : vector<8x128xf32>
    %133 = arith.divf %131, %132 : vector<8x128xf32>
    %134 = vector.extract_strided_slice %133 {offsets = [0, 0], sizes = [8, 32], strides = [1, 1]} : vector<8x128xf32> to vector<8x32xf32>
    %135 = vector.extract_strided_slice %133 {offsets = [0, 32], sizes = [8, 32], strides = [1, 1]} : vector<8x128xf32> to vector<8x32xf32>
    %136 = vector.extract_strided_slice %128 {offsets = [0, 64], sizes = [8, 32], strides = [1, 1]} : vector<8x128xf32> to vector<8x32xf32>
    %137 = math.tanh %136 : vector<8x32xf32>
    %138 = vector.extract_strided_slice %133 {offsets = [0, 96], sizes = [8, 32], strides = [1, 1]} : vector<8x128xf32> to vector<8x32xf32>
    %139 = arith.mulf %135, %122 : vector<8x32xf32>
    %140 = arith.mulf %134, %137 : vector<8x32xf32>
    %141 = arith.addf %139, %140 : vector<8x32xf32>
    %142 = math.tanh %141 : vector<8x32xf32>
    %143 = arith.mulf %138, %142 : vector<8x32xf32>
    %144 = vector.extract_strided_slice %45 {offsets = [40, 0], sizes = [8, 128], strides = [1, 1]} : vector<64x128xf32> to vector<8x128xf32>
    %145 = arith.truncf %143 : vector<8x32xf32> to vector<8x32xbf16>
    %cst_29 = arith.constant dense<0.000000e+00> : vector<8x128xf32>
    %146 = tpu.matmul %145, %46, %cst_29 {dimension_numbers = #tpu.dot_dimension_numbers<[1], [0], [0], [1], [0, 0, 1, 1], [], []>} : vector<8x32xbf16>, vector<32x128xbf16>, vector<8x128xf32> -> vector<8x128xf32>
    %147 = arith.addf %144, %146 : vector<8x128xf32>
    %148 = arith.negf %147 : vector<8x128xf32>
    %149 = math.exp %148 : vector<8x128xf32>
    %cst_30 = arith.constant 1.000000e+00 : f32
    %150 = vector.broadcast %cst_30 : f32 to vector<8x128xf32>
    %151 = arith.addf %150, %149 : vector<8x128xf32>
    %152 = arith.divf %150, %151 : vector<8x128xf32>
    %153 = vector.extract_strided_slice %152 {offsets = [0, 0], sizes = [8, 32], strides = [1, 1]} : vector<8x128xf32> to vector<8x32xf32>
    %154 = vector.extract_strided_slice %152 {offsets = [0, 32], sizes = [8, 32], strides = [1, 1]} : vector<8x128xf32> to vector<8x32xf32>
    %155 = vector.extract_strided_slice %147 {offsets = [0, 64], sizes = [8, 32], strides = [1, 1]} : vector<8x128xf32> to vector<8x32xf32>
    %156 = math.tanh %155 : vector<8x32xf32>
    %157 = vector.extract_strided_slice %152 {offsets = [0, 96], sizes = [8, 32], strides = [1, 1]} : vector<8x128xf32> to vector<8x32xf32>
    %158 = arith.mulf %154, %141 : vector<8x32xf32>
    %159 = arith.mulf %153, %156 : vector<8x32xf32>
    %160 = arith.addf %158, %159 : vector<8x32xf32>
    %161 = math.tanh %160 : vector<8x32xf32>
    %162 = arith.mulf %157, %161 : vector<8x32xf32>
    %163 = vector.extract_strided_slice %45 {offsets = [48, 0], sizes = [8, 128], strides = [1, 1]} : vector<64x128xf32> to vector<8x128xf32>
    %164 = arith.truncf %162 : vector<8x32xf32> to vector<8x32xbf16>
    %cst_31 = arith.constant dense<0.000000e+00> : vector<8x128xf32>
    %165 = tpu.matmul %164, %46, %cst_31 {dimension_numbers = #tpu.dot_dimension_numbers<[1], [0], [0], [1], [0, 0, 1, 1], [], []>} : vector<8x32xbf16>, vector<32x128xbf16>, vector<8x128xf32> -> vector<8x128xf32>
    %166 = arith.addf %163, %165 : vector<8x128xf32>
    %167 = arith.negf %166 : vector<8x128xf32>
    %168 = math.exp %167 : vector<8x128xf32>
    %cst_32 = arith.constant 1.000000e+00 : f32
    %169 = vector.broadcast %cst_32 : f32 to vector<8x128xf32>
    %170 = arith.addf %169, %168 : vector<8x128xf32>
    %171 = arith.divf %169, %170 : vector<8x128xf32>
    %172 = vector.extract_strided_slice %171 {offsets = [0, 0], sizes = [8, 32], strides = [1, 1]} : vector<8x128xf32> to vector<8x32xf32>
    %173 = vector.extract_strided_slice %171 {offsets = [0, 32], sizes = [8, 32], strides = [1, 1]} : vector<8x128xf32> to vector<8x32xf32>
    %174 = vector.extract_strided_slice %166 {offsets = [0, 64], sizes = [8, 32], strides = [1, 1]} : vector<8x128xf32> to vector<8x32xf32>
    %175 = math.tanh %174 : vector<8x32xf32>
    %176 = vector.extract_strided_slice %171 {offsets = [0, 96], sizes = [8, 32], strides = [1, 1]} : vector<8x128xf32> to vector<8x32xf32>
    %177 = arith.mulf %173, %160 : vector<8x32xf32>
    %178 = arith.mulf %172, %175 : vector<8x32xf32>
    %179 = arith.addf %177, %178 : vector<8x32xf32>
    %180 = math.tanh %179 : vector<8x32xf32>
    %181 = arith.mulf %176, %180 : vector<8x32xf32>
    %182 = vector.extract_strided_slice %45 {offsets = [56, 0], sizes = [8, 128], strides = [1, 1]} : vector<64x128xf32> to vector<8x128xf32>
    %183 = arith.truncf %181 : vector<8x32xf32> to vector<8x32xbf16>
    %cst_33 = arith.constant dense<0.000000e+00> : vector<8x128xf32>
    %184 = tpu.matmul %183, %46, %cst_33 {dimension_numbers = #tpu.dot_dimension_numbers<[1], [0], [0], [1], [0, 0, 1, 1], [], []>} : vector<8x32xbf16>, vector<32x128xbf16>, vector<8x128xf32> -> vector<8x128xf32>
    %185 = arith.addf %182, %184 : vector<8x128xf32>
    %186 = arith.negf %185 : vector<8x128xf32>
    %187 = math.exp %186 : vector<8x128xf32>
    %cst_34 = arith.constant 1.000000e+00 : f32
    %188 = vector.broadcast %cst_34 : f32 to vector<8x128xf32>
    %189 = arith.addf %188, %187 : vector<8x128xf32>
    %190 = arith.divf %188, %189 : vector<8x128xf32>
    %191 = vector.extract_strided_slice %190 {offsets = [0, 0], sizes = [8, 32], strides = [1, 1]} : vector<8x128xf32> to vector<8x32xf32>
    %192 = vector.extract_strided_slice %190 {offsets = [0, 32], sizes = [8, 32], strides = [1, 1]} : vector<8x128xf32> to vector<8x32xf32>
    %193 = vector.extract_strided_slice %185 {offsets = [0, 64], sizes = [8, 32], strides = [1, 1]} : vector<8x128xf32> to vector<8x32xf32>
    %194 = math.tanh %193 : vector<8x32xf32>
    %195 = vector.extract_strided_slice %190 {offsets = [0, 96], sizes = [8, 32], strides = [1, 1]} : vector<8x128xf32> to vector<8x32xf32>
    %196 = arith.mulf %192, %179 : vector<8x32xf32>
    %197 = arith.mulf %191, %194 : vector<8x32xf32>
    %198 = arith.addf %196, %197 : vector<8x32xf32>
    %199 = math.tanh %198 : vector<8x32xf32>
    %200 = arith.mulf %195, %199 : vector<8x32xf32>
    %cst_35 = arith.constant dense<0.000000e+00> : vector<8x128xf32>
    %201 = tpu.matmul %200, %4, %cst_35 {dimension_numbers = #tpu.dot_dimension_numbers<[1], [0], [0], [1], [0, 0, 1, 1], [], []>} : vector<8x32xf32>, vector<32x128xf32>, vector<8x128xf32> -> vector<8x128xf32>
    %202 = vector.broadcast %12 : vector<1x128xf32> to vector<8x128xf32>
    %203 = arith.addf %201, %202 : vector<8x128xf32>
    %204 = vector.extract_strided_slice %203 {offsets = [0, 0], sizes = [8, 4], strides = [1, 1]} : vector<8x128xf32> to vector<8x4xf32>
    %205 = vector.extract_strided_slice %203 {offsets = [0, 4], sizes = [8, 4], strides = [1, 1]} : vector<8x128xf32> to vector<8x4xf32>
    %cst_36 = arith.constant 0.000000e+00 : f32
    %206 = vector.broadcast %cst_36 : f32 to vector<8x4xf32>
    %207 = arith.maximumf %205, %206 : vector<8x4xf32>
    %208 = vector.broadcast %cst_36 : f32 to vector<8x4xf32>
    %209 = arith.subf %205, %208 : vector<8x4xf32>
    %210 = arith.cmpf one, %209, %209 : vector<8x4xf32>
    %211 = vector.broadcast %cst_36 : f32 to vector<8x4xf32>
    %212 = arith.addf %205, %211 : vector<8x4xf32>
    %213 = math.absf %209 : vector<8x4xf32>
    %cst_37 = arith.constant 0.000000e+00 : f32
    %214 = vector.broadcast %cst_37 : f32 to vector<8x4xf32>
    %215 = arith.subf %214, %213 : vector<8x4xf32>
    %216 = math.exp %215 : vector<8x4xf32>
    %217 = math.log1p %216 : vector<8x4xf32>
    %218 = arith.addf %207, %217 : vector<8x4xf32>
    %219 = arith.select %210, %212, %218 : vector<8x4xi1>, vector<8x4xf32>
    %220 = arith.mulf %219, %18 : vector<8x4xf32>
    %221 = arith.addf %204, %220 : vector<8x4xf32>
    %cst_38 = arith.constant dense<0.000000e+00> : vector<8x128xf32>
    %222 = tpu.matmul %221, %5, %cst_38 {dimension_numbers = #tpu.dot_dimension_numbers<[1], [0], [0], [1], [0, 0, 1, 1], [], []>} : vector<8x4xf32>, vector<4x128xf32>, vector<8x128xf32> -> vector<8x128xf32>
    %223 = vector.broadcast %13 : vector<1x128xf32> to vector<8x128xf32>
    %224 = arith.addf %222, %223 : vector<8x128xf32>
    %225 = arith.truncf %6 : vector<32x128xf32> to vector<32x128xbf16>
    %cst_39 = arith.constant 0.000000e+00 : f32
    %226 = vector.broadcast %cst_39 : f32 to vector<8x32xf32>
    %cst_40 = arith.constant 0.000000e+00 : f32
    %227 = vector.broadcast %cst_40 : f32 to vector<8x32xf32>
    %228 = arith.truncf %226 : vector<8x32xf32> to vector<8x32xbf16>
    %cst_41 = arith.constant dense<0.000000e+00> : vector<8x128xf32>
    %229 = tpu.matmul %228, %225, %cst_41 {dimension_numbers = #tpu.dot_dimension_numbers<[1], [0], [0], [1], [0, 0, 1, 1], [], []>} : vector<8x32xbf16>, vector<32x128xbf16>, vector<8x128xf32> -> vector<8x128xf32>
    %230 = arith.addf %224, %229 : vector<8x128xf32>
    %231 = arith.negf %230 : vector<8x128xf32>
    %232 = math.exp %231 : vector<8x128xf32>
    %cst_42 = arith.constant 1.000000e+00 : f32
    %233 = vector.broadcast %cst_42 : f32 to vector<8x128xf32>
    %234 = arith.addf %233, %232 : vector<8x128xf32>
    %235 = arith.divf %233, %234 : vector<8x128xf32>
    %236 = vector.extract_strided_slice %235 {offsets = [0, 0], sizes = [8, 32], strides = [1, 1]} : vector<8x128xf32> to vector<8x32xf32>
    %237 = vector.extract_strided_slice %235 {offsets = [0, 32], sizes = [8, 32], strides = [1, 1]} : vector<8x128xf32> to vector<8x32xf32>
    %238 = vector.extract_strided_slice %230 {offsets = [0, 64], sizes = [8, 32], strides = [1, 1]} : vector<8x128xf32> to vector<8x32xf32>
    %239 = math.tanh %238 : vector<8x32xf32>
    %240 = vector.extract_strided_slice %235 {offsets = [0, 96], sizes = [8, 32], strides = [1, 1]} : vector<8x128xf32> to vector<8x32xf32>
    %241 = arith.mulf %237, %227 : vector<8x32xf32>
    %242 = arith.mulf %236, %239 : vector<8x32xf32>
    %243 = arith.addf %241, %242 : vector<8x32xf32>
    %244 = math.tanh %243 : vector<8x32xf32>
    %245 = arith.mulf %240, %244 : vector<8x32xf32>
    %246 = arith.truncf %245 : vector<8x32xf32> to vector<8x32xbf16>
    %cst_43 = arith.constant dense<0.000000e+00> : vector<8x128xf32>
    %247 = tpu.matmul %246, %225, %cst_43 {dimension_numbers = #tpu.dot_dimension_numbers<[1], [0], [0], [1], [0, 0, 1, 1], [], []>} : vector<8x32xbf16>, vector<32x128xbf16>, vector<8x128xf32> -> vector<8x128xf32>
    %248 = arith.addf %224, %247 : vector<8x128xf32>
    %249 = arith.negf %248 : vector<8x128xf32>
    %250 = math.exp %249 : vector<8x128xf32>
    %cst_44 = arith.constant 1.000000e+00 : f32
    %251 = vector.broadcast %cst_44 : f32 to vector<8x128xf32>
    %252 = arith.addf %251, %250 : vector<8x128xf32>
    %253 = arith.divf %251, %252 : vector<8x128xf32>
    %254 = vector.extract_strided_slice %253 {offsets = [0, 0], sizes = [8, 32], strides = [1, 1]} : vector<8x128xf32> to vector<8x32xf32>
    %255 = vector.extract_strided_slice %253 {offsets = [0, 32], sizes = [8, 32], strides = [1, 1]} : vector<8x128xf32> to vector<8x32xf32>
    %256 = vector.extract_strided_slice %248 {offsets = [0, 64], sizes = [8, 32], strides = [1, 1]} : vector<8x128xf32> to vector<8x32xf32>
    %257 = math.tanh %256 : vector<8x32xf32>
    %258 = vector.extract_strided_slice %253 {offsets = [0, 96], sizes = [8, 32], strides = [1, 1]} : vector<8x128xf32> to vector<8x32xf32>
    %259 = arith.mulf %255, %243 : vector<8x32xf32>
    %260 = arith.mulf %254, %257 : vector<8x32xf32>
    %261 = arith.addf %259, %260 : vector<8x32xf32>
    %262 = math.tanh %261 : vector<8x32xf32>
    %263 = arith.mulf %258, %262 : vector<8x32xf32>
    %264 = arith.truncf %263 : vector<8x32xf32> to vector<8x32xbf16>
    %cst_45 = arith.constant dense<0.000000e+00> : vector<8x128xf32>
    %265 = tpu.matmul %264, %225, %cst_45 {dimension_numbers = #tpu.dot_dimension_numbers<[1], [0], [0], [1], [0, 0, 1, 1], [], []>} : vector<8x32xbf16>, vector<32x128xbf16>, vector<8x128xf32> -> vector<8x128xf32>
    %266 = arith.addf %224, %265 : vector<8x128xf32>
    %267 = arith.negf %266 : vector<8x128xf32>
    %268 = math.exp %267 : vector<8x128xf32>
    %cst_46 = arith.constant 1.000000e+00 : f32
    %269 = vector.broadcast %cst_46 : f32 to vector<8x128xf32>
    %270 = arith.addf %269, %268 : vector<8x128xf32>
    %271 = arith.divf %269, %270 : vector<8x128xf32>
    %272 = vector.extract_strided_slice %271 {offsets = [0, 0], sizes = [8, 32], strides = [1, 1]} : vector<8x128xf32> to vector<8x32xf32>
    %273 = vector.extract_strided_slice %271 {offsets = [0, 32], sizes = [8, 32], strides = [1, 1]} : vector<8x128xf32> to vector<8x32xf32>
    %274 = vector.extract_strided_slice %266 {offsets = [0, 64], sizes = [8, 32], strides = [1, 1]} : vector<8x128xf32> to vector<8x32xf32>
    %275 = math.tanh %274 : vector<8x32xf32>
    %276 = vector.extract_strided_slice %271 {offsets = [0, 96], sizes = [8, 32], strides = [1, 1]} : vector<8x128xf32> to vector<8x32xf32>
    %277 = arith.mulf %273, %261 : vector<8x32xf32>
    %278 = arith.mulf %272, %275 : vector<8x32xf32>
    %279 = arith.addf %277, %278 : vector<8x32xf32>
    %280 = math.tanh %279 : vector<8x32xf32>
    %281 = arith.mulf %276, %280 : vector<8x32xf32>
    %282 = arith.truncf %281 : vector<8x32xf32> to vector<8x32xbf16>
    %cst_47 = arith.constant dense<0.000000e+00> : vector<8x128xf32>
    %283 = tpu.matmul %282, %225, %cst_47 {dimension_numbers = #tpu.dot_dimension_numbers<[1], [0], [0], [1], [0, 0, 1, 1], [], []>} : vector<8x32xbf16>, vector<32x128xbf16>, vector<8x128xf32> -> vector<8x128xf32>
    %284 = arith.addf %224, %283 : vector<8x128xf32>
    %285 = arith.negf %284 : vector<8x128xf32>
    %286 = math.exp %285 : vector<8x128xf32>
    %cst_48 = arith.constant 1.000000e+00 : f32
    %287 = vector.broadcast %cst_48 : f32 to vector<8x128xf32>
    %288 = arith.addf %287, %286 : vector<8x128xf32>
    %289 = arith.divf %287, %288 : vector<8x128xf32>
    %290 = vector.extract_strided_slice %289 {offsets = [0, 0], sizes = [8, 32], strides = [1, 1]} : vector<8x128xf32> to vector<8x32xf32>
    %291 = vector.extract_strided_slice %289 {offsets = [0, 32], sizes = [8, 32], strides = [1, 1]} : vector<8x128xf32> to vector<8x32xf32>
    %292 = vector.extract_strided_slice %284 {offsets = [0, 64], sizes = [8, 32], strides = [1, 1]} : vector<8x128xf32> to vector<8x32xf32>
    %293 = math.tanh %292 : vector<8x32xf32>
    %294 = vector.extract_strided_slice %289 {offsets = [0, 96], sizes = [8, 32], strides = [1, 1]} : vector<8x128xf32> to vector<8x32xf32>
    %295 = arith.mulf %291, %279 : vector<8x32xf32>
    %296 = arith.mulf %290, %293 : vector<8x32xf32>
    %297 = arith.addf %295, %296 : vector<8x32xf32>
    %298 = math.tanh %297 : vector<8x32xf32>
    %299 = arith.mulf %294, %298 : vector<8x32xf32>
    %300 = arith.truncf %299 : vector<8x32xf32> to vector<8x32xbf16>
    %cst_49 = arith.constant dense<0.000000e+00> : vector<8x128xf32>
    %301 = tpu.matmul %300, %225, %cst_49 {dimension_numbers = #tpu.dot_dimension_numbers<[1], [0], [0], [1], [0, 0, 1, 1], [], []>} : vector<8x32xbf16>, vector<32x128xbf16>, vector<8x128xf32> -> vector<8x128xf32>
    %302 = arith.addf %224, %301 : vector<8x128xf32>
    %303 = arith.negf %302 : vector<8x128xf32>
    %304 = math.exp %303 : vector<8x128xf32>
    %cst_50 = arith.constant 1.000000e+00 : f32
    %305 = vector.broadcast %cst_50 : f32 to vector<8x128xf32>
    %306 = arith.addf %305, %304 : vector<8x128xf32>
    %307 = arith.divf %305, %306 : vector<8x128xf32>
    %308 = vector.extract_strided_slice %307 {offsets = [0, 0], sizes = [8, 32], strides = [1, 1]} : vector<8x128xf32> to vector<8x32xf32>
    %309 = vector.extract_strided_slice %307 {offsets = [0, 32], sizes = [8, 32], strides = [1, 1]} : vector<8x128xf32> to vector<8x32xf32>
    %310 = vector.extract_strided_slice %302 {offsets = [0, 64], sizes = [8, 32], strides = [1, 1]} : vector<8x128xf32> to vector<8x32xf32>
    %311 = math.tanh %310 : vector<8x32xf32>
    %312 = vector.extract_strided_slice %307 {offsets = [0, 96], sizes = [8, 32], strides = [1, 1]} : vector<8x128xf32> to vector<8x32xf32>
    %313 = arith.mulf %309, %297 : vector<8x32xf32>
    %314 = arith.mulf %308, %311 : vector<8x32xf32>
    %315 = arith.addf %313, %314 : vector<8x32xf32>
    %316 = math.tanh %315 : vector<8x32xf32>
    %317 = arith.mulf %312, %316 : vector<8x32xf32>
    %318 = arith.truncf %317 : vector<8x32xf32> to vector<8x32xbf16>
    %cst_51 = arith.constant dense<0.000000e+00> : vector<8x128xf32>
    %319 = tpu.matmul %318, %225, %cst_51 {dimension_numbers = #tpu.dot_dimension_numbers<[1], [0], [0], [1], [0, 0, 1, 1], [], []>} : vector<8x32xbf16>, vector<32x128xbf16>, vector<8x128xf32> -> vector<8x128xf32>
    %320 = arith.addf %224, %319 : vector<8x128xf32>
    %321 = arith.negf %320 : vector<8x128xf32>
    %322 = math.exp %321 : vector<8x128xf32>
    %cst_52 = arith.constant 1.000000e+00 : f32
    %323 = vector.broadcast %cst_52 : f32 to vector<8x128xf32>
    %324 = arith.addf %323, %322 : vector<8x128xf32>
    %325 = arith.divf %323, %324 : vector<8x128xf32>
    %326 = vector.extract_strided_slice %325 {offsets = [0, 0], sizes = [8, 32], strides = [1, 1]} : vector<8x128xf32> to vector<8x32xf32>
    %327 = vector.extract_strided_slice %325 {offsets = [0, 32], sizes = [8, 32], strides = [1, 1]} : vector<8x128xf32> to vector<8x32xf32>
    %328 = vector.extract_strided_slice %320 {offsets = [0, 64], sizes = [8, 32], strides = [1, 1]} : vector<8x128xf32> to vector<8x32xf32>
    %329 = math.tanh %328 : vector<8x32xf32>
    %330 = vector.extract_strided_slice %325 {offsets = [0, 96], sizes = [8, 32], strides = [1, 1]} : vector<8x128xf32> to vector<8x32xf32>
    %331 = arith.mulf %327, %315 : vector<8x32xf32>
    %332 = arith.mulf %326, %329 : vector<8x32xf32>
    %333 = arith.addf %331, %332 : vector<8x32xf32>
    %334 = math.tanh %333 : vector<8x32xf32>
    %335 = arith.mulf %330, %334 : vector<8x32xf32>
    %336 = arith.truncf %335 : vector<8x32xf32> to vector<8x32xbf16>
    %cst_53 = arith.constant dense<0.000000e+00> : vector<8x128xf32>
    %337 = tpu.matmul %336, %225, %cst_53 {dimension_numbers = #tpu.dot_dimension_numbers<[1], [0], [0], [1], [0, 0, 1, 1], [], []>} : vector<8x32xbf16>, vector<32x128xbf16>, vector<8x128xf32> -> vector<8x128xf32>
    %338 = arith.addf %224, %337 : vector<8x128xf32>
    %339 = arith.negf %338 : vector<8x128xf32>
    %340 = math.exp %339 : vector<8x128xf32>
    %cst_54 = arith.constant 1.000000e+00 : f32
    %341 = vector.broadcast %cst_54 : f32 to vector<8x128xf32>
    %342 = arith.addf %341, %340 : vector<8x128xf32>
    %343 = arith.divf %341, %342 : vector<8x128xf32>
    %344 = vector.extract_strided_slice %343 {offsets = [0, 0], sizes = [8, 32], strides = [1, 1]} : vector<8x128xf32> to vector<8x32xf32>
    %345 = vector.extract_strided_slice %343 {offsets = [0, 32], sizes = [8, 32], strides = [1, 1]} : vector<8x128xf32> to vector<8x32xf32>
    %346 = vector.extract_strided_slice %338 {offsets = [0, 64], sizes = [8, 32], strides = [1, 1]} : vector<8x128xf32> to vector<8x32xf32>
    %347 = math.tanh %346 : vector<8x32xf32>
    %348 = vector.extract_strided_slice %343 {offsets = [0, 96], sizes = [8, 32], strides = [1, 1]} : vector<8x128xf32> to vector<8x32xf32>
    %349 = arith.mulf %345, %333 : vector<8x32xf32>
    %350 = arith.mulf %344, %347 : vector<8x32xf32>
    %351 = arith.addf %349, %350 : vector<8x32xf32>
    %352 = math.tanh %351 : vector<8x32xf32>
    %353 = arith.mulf %348, %352 : vector<8x32xf32>
    %354 = arith.truncf %353 : vector<8x32xf32> to vector<8x32xbf16>
    %cst_55 = arith.constant dense<0.000000e+00> : vector<8x128xf32>
    %355 = tpu.matmul %354, %225, %cst_55 {dimension_numbers = #tpu.dot_dimension_numbers<[1], [0], [0], [1], [0, 0, 1, 1], [], []>} : vector<8x32xbf16>, vector<32x128xbf16>, vector<8x128xf32> -> vector<8x128xf32>
    %356 = arith.addf %224, %355 : vector<8x128xf32>
    %357 = arith.negf %356 : vector<8x128xf32>
    %358 = math.exp %357 : vector<8x128xf32>
    %cst_56 = arith.constant 1.000000e+00 : f32
    %359 = vector.broadcast %cst_56 : f32 to vector<8x128xf32>
    %360 = arith.addf %359, %358 : vector<8x128xf32>
    %361 = arith.divf %359, %360 : vector<8x128xf32>
    %362 = vector.extract_strided_slice %361 {offsets = [0, 0], sizes = [8, 32], strides = [1, 1]} : vector<8x128xf32> to vector<8x32xf32>
    %363 = vector.extract_strided_slice %361 {offsets = [0, 32], sizes = [8, 32], strides = [1, 1]} : vector<8x128xf32> to vector<8x32xf32>
    %364 = vector.extract_strided_slice %356 {offsets = [0, 64], sizes = [8, 32], strides = [1, 1]} : vector<8x128xf32> to vector<8x32xf32>
    %365 = math.tanh %364 : vector<8x32xf32>
    %366 = vector.extract_strided_slice %361 {offsets = [0, 96], sizes = [8, 32], strides = [1, 1]} : vector<8x128xf32> to vector<8x32xf32>
    %367 = arith.mulf %363, %351 : vector<8x32xf32>
    %368 = arith.mulf %362, %365 : vector<8x32xf32>
    %369 = arith.addf %367, %368 : vector<8x32xf32>
    %370 = math.tanh %369 : vector<8x32xf32>
    %371 = arith.mulf %366, %370 : vector<8x32xf32>
    %372 = tpu.concatenate %245, %263, %281, %299, %317, %335, %353, %371 in 0 : vector<8x32xf32>, vector<8x32xf32>, vector<8x32xf32>, vector<8x32xf32>, vector<8x32xf32>, vector<8x32xf32>, vector<8x32xf32>, vector<8x32xf32> -> vector<64x32xf32>
    %cst_57 = arith.constant dense<0.000000e+00> : vector<64x128xf32>
    %373 = tpu.matmul %372, %7, %cst_57 {dimension_numbers = #tpu.dot_dimension_numbers<[1], [0], [0], [1], [0, 0, 1, 1], [], []>} : vector<64x32xf32>, vector<32x128xf32>, vector<64x128xf32> -> vector<64x128xf32>
    %374 = vector.broadcast %14 : vector<1x128xf32> to vector<64x128xf32>
    %375 = arith.addf %373, %374 : vector<64x128xf32>
    %376 = math.tanh %375 : vector<64x128xf32>
    %c0_58 = arith.constant 0 : index
    %c0_59 = arith.constant 0 : index
    %377 = vector.load %arg3[%c0_58, %c0_59] : memref<64x128xf32, #tpu.memory_space<vmem>>, vector<64x128xf32>
    tpu.vector_store %arg3[%c0_58, %c0_59], %376 {strides = array<i32>} : memref<64x128xf32, #tpu.memory_space<vmem>>, vector<64x128xf32>,
    %378 = tpu.concatenate %204, %219, %27, %42, %221 in 1 : vector<8x4xf32>, vector<8x4xf32>, vector<8x4xf32>, vector<8x4xf32>, vector<8x4xf32> -> vector<8x20xf32>
    %c0_60 = arith.constant 0 : index
    %c0_61 = arith.constant 0 : index
    %379 = vector.load %arg2[%c0_60, %c0_61] : memref<8x20xf32, #tpu.memory_space<vmem>>, vector<8x20xf32>
    tpu.vector_store %arg2[%c0_60, %c0_61], %378 {strides = array<i32>} : memref<8x20xf32, #tpu.memory_space<vmem>>, vector<8x20xf32>,
    return
  }
}

</mosaic_0001>

<llo_original>
// kernel: skill_prior_forward.1
$region0: #{skill_prior_forward.1}
  #allocation0 [shape = 'u32[]', space=smem, size = 0x4, offset = 0x4, fixed_abs, tag = 'smem constant byte address 0x4 - core index']
  #allocation1 [shape = 'u32[144,128]{1,0:T(1,128)}', space=vmem, size = 0x12000, scoped, tag = 'internal scratch']
  %s0 = inlined_call_operand.vmem [shape: f32[80,16], index: 0, kind: input, shape index: {}]
  %s1 = inlined_call_operand.vmem [shape: f32[208,128], index: 1, kind: input, shape index: {}]
  %s2 = inlined_call_operand.vmem [shape: f32[8,20], index: 2, kind: output, shape index: {0}]
  %s3 = inlined_call_operand.vmem [shape: f32[64,128], index: 3, kind: output, shape index: {1}]
  %4 = xla_tuple %s2, %s3
  %s5 = sld [smem:[#allocation0]]
  $region26: #{skill_prior_forward.1} parent=0
    _
  %s7 = ssub.s32 1, %s5
  %s8 = scalar_select 0, %s7, %s5
  // Predicated region
  $region2: #{skill_prior_forward.1} parent=0 // pred_check
    _
  $region3: #{skill_prior_forward.1} parent=0 // pred_check_branch
    %10 = sbr.rel (0) target = $region5
  $region4: #{skill_prior_forward.1} parent=0 // pred_region
    _
  $region5: #{skill_prior_forward.1} parent=0 // pred_fallthru
    _
  // Predicated region
  $region6: #{skill_prior_forward.1} parent=0 // pred_check
    _
  $region7: #{skill_prior_forward.1} parent=0 // pred_check_branch
    %12 = sbr.rel (0) target = $region9
  $region8: #{skill_prior_forward.1} parent=0 // pred_region
    _
  $region9: #{skill_prior_forward.1} parent=0 // pred_fallthru
    _
  %v14 = vld [vmem:[%s1] sm:$0xff]
  %v15 = vld [vmem:[%s1 + $0x8] sm:$0xff]
  %v16 = vld [vmem:[%s1 + $0x10] sm:$0xff]
  %v17 = vld [vmem:[%s1 + $0x18] sm:$0xff]
  %v18 = vld [vmem:[%s1 + $0x20] sm:$0xff]
  %v19 = vld [vmem:[%s1 + $0x28] sm:$0xff]
  %v20 = vld [vmem:[%s1 + $0x30] sm:$0xff]
  %v21 = vld [vmem:[%s1 + $0x38] sm:$0xff]
  %v22 = vld [vmem:[%s1 + $0x40] sm:$0xff]
  %v23 = vld [vmem:[%s1 + $0x48] sm:$0xff]
  %v24 = vld [vmem:[%s1 + $0x50] sm:$0xff]
  %v25 = vld [vmem:[%s1 + $0x58] sm:$0xff]
  %v26 = vld [vmem:[%s1 + $0x60] sm:$0xff]
  %v27 = vld [vmem:[%s1 + $0x68] sm:$0xff]
  %v28 = vld [vmem:[%s1 + $0x70] sm:$0xff]
  %v29 = vld [vmem:[%s1 + $0x78] sm:$0xff]
  %v30 = vld [vmem:[%s1 + $0x80] sm:$0xf]
  %v31 = vld [vmem:[%s1 + $0x88] sm:$0xff]
  %v32 = vld [vmem:[%s1 + $0x90] sm:$0xff]
  %v33 = vld [vmem:[%s1 + $0x98] sm:$0xff]
  %v34 = vld [vmem:[%s1 + $0xa0] sm:$0xff]
  %v35 = vld [vmem:[%s1 + $0xa8] sm:$0xff]
  %v36 = vld [vmem:[%s1 + $0xb0] sm:$0xff]
  %v37 = vld [vmem:[%s1 + $0xb8] sm:$0xff]
  %v38 = vld [vmem:[%s1 + $0xc0] sm:$0xff]
  %v39 = vld [vmem:[%s1 + $0xc8] sm:$0xff]
  %v40 = vld [vmem:[%s0] sm:$0xff]
  %v41 = vld [vmem:[%s0 + $0x8] sm:$0xff]
  %v42 = vld [vmem:[%s0 + $0x10] sm:$0xff]
  %v43 = vld [vmem:[%s0 + $0x18] sm:$0xff]
  %v44 = vld [vmem:[%s0 + $0x20] sm:$0xff]
  %v45 = vld [vmem:[%s0 + $0x28] sm:$0xff]
  %v46 = vld [vmem:[%s0 + $0x30] sm:$0xff]
  %v47 = vld [vmem:[%s0 + $0x38] sm:$0xff]
  %v48 = vld [vmem:[%s0 + $0x40] sm:$0xff]
  %v49 = vld [vmem:[%s0 + $0x48] sm:$0xff]
  %v50 = vlaneseq
  %v51 = vshrl.u32 %v50, 7
  %v52 = vsub.s32 0, %v51
  %v53 = vrot.slane %v39, %v52
  %vm54 = vcmask 130048
  %v56 = vsel %vm54, %v40, 0
  %58 = vmatprep.subr.mxu0 0.0
  %59 = vmatpush1.msra.mxu0 %v14
  %60 = vmatprep.subr.mxu0 0.0
  %61 = vmatpush1.msra.mxu0 %v15
  %62 = vmatprep.subr.mxu0 0.0
  %63 = vmatpush1.msra.mxu0 0.0
  %64 = vmatprep.subr.mxu0 0.0
  %65 = vmatpush1.msra.mxu0 0.0
  %66 = vmatprep.subr.mxu0 0.0
  %67 = vmatpush1.msra.mxu0 0.0
  %68 = vmatprep.subr.mxu0 0.0
  %69 = vmatpush1.msra.mxu0 0.0
  %70 = vmatprep.subr.mxu0 0.0
  %71 = vmatpush1.msra.mxu0 0.0
  %72 = vmatprep.subr.mxu0 0.0
  %73 = vmatpush1.msra.mxu0 0.0
  %74 = vmatprep.subr.mxu0 0.0
  %75 = vmatpush1.msra.mxu0 0.0
  %76 = vmatprep.subr.mxu0 0.0
  %77 = vmatpush1.msra.mxu0 0.0
  %78 = vmatprep.subr.mxu0 0.0
  %79 = vmatpush1.msra.mxu0 0.0
  %80 = vmatprep.subr.mxu0 0.0
  %81 = vmatpush1.msra.mxu0 0.0
  %82 = vmatprep.subr.mxu0 0.0
  %83 = vmatpush1.msra.mxu0 0.0
  %84 = vmatprep.subr.mxu0 0.0
  %85 = vmatpush1.msra.mxu0 0.0
  %86 = vmatprep.subr.mxu0 0.0
  %87 = vmatpush1.msra.mxu0 0.0
  %88 = vmatprep.subr.mxu0 0.0
  %89 = vmatpush1.msra.mxu0 0.0
  %90 = vmatprep.subr.mxu0 0.0
  %91 = vmatpush1.msra.mxu0 0.0
  %92 = vmatprep.subr.mxu0 0.0
  %93 = vmatpush1.msra.mxu0 0.0
  %94 = vmatprep.subr.mxu0 0.0
  %95 = vmatpush1.msra.mxu0 0.0
  %96 = vmatprep.subr.mxu0 0.0
  %97 = vmatpush1.msra.mxu0 0.0
  %98 = vmatprep.subr.mxu0 0.0
  %99 = vmatpush1.msra.mxu0 0.0
  %100 = vmatprep.subr.mxu0 0.0
  %101 = vmatpush1.msra.mxu0 0.0
  %102 = vmatprep.subr.mxu0 0.0
  %103 = vmatpush1.msra.mxu0 0.0
  %104 = vmatprep.subr.mxu0 0.0
  %105 = vmatpush1.msra.mxu0 0.0
  %106 = vmatprep.subr.mxu0 0.0
  %107 = vmatpush1.msra.mxu0 0.0
  %108 = vmatprep.subr.mxu0 0.0
  %109 = vmatpush1.msra.mxu0 0.0
  %110 = vmatprep.subr.mxu0 0.0
  %111 = vmatpush1.msra.mxu0 0.0
  %112 = vmatprep.subr.mxu0 0.0
  %113 = vmatpush1.msra.mxu0 0.0
  %114 = vmatprep.subr.mxu0 0.0
  %115 = vmatpush1.msra.mxu0 0.0
  %116 = vmatprep.subr.mxu0 0.0
  %117 = vmatpush1.msra.mxu0 0.0
  %118 = vmatprep.subr.mxu0 0.0
  %119 = vmatpush1.msra.mxu0 0.0
  %120 = vmatprep.subr.mxu0 0.0
  %121 = vmatpush1.msra.mxu0 0.0
  %122 = vmatprep.mubr.f32.mxu0 0.0
  %123 = vmatmul.mubr.f32.gmra.mrb[0].mxu0 %v56
  %v124 = vpop.f32.mrb[0].mxu0
  %v125 = vadd.f32 %v53, %v124
  %v126 = vpop.f32.mrb[0].mxu0
  %127 = vdwg.mxu0
  %v128 = vtanh.pop %v125
  %v129 = vlaneseq
  %v130 = vshrl.u32 %v129, 7
  %v131 = vsub.s32 1, %v130
  %v132 = vrot.slane %v39, %v131
  %vm133 = vcmask 261120
  %v135 = vsel %vm133, %v128, 0
  %137 = vmatprep.subr.mxu0 0.0
  %138 = vmatpush1.msra.mxu0 %v16
  %139 = vmatprep.subr.mxu0 0.0
  %140 = vmatpush1.msra.mxu0 %v17
  %141 = vmatprep.subr.mxu0 0.0
  %142 = vmatpush1.msra.mxu0 %v18
  %143 = vmatprep.subr.mxu0 0.0
  %144 = vmatpush1.msra.mxu0 %v19
  %145 = vmatprep.subr.mxu0 0.0
  %146 = vmatpush1.msra.mxu0 0.0
  %147 = vmatprep.subr.mxu0 0.0
  %148 = vmatpush1.msra.mxu0 0.0
  %149 = vmatprep.subr.mxu0 0.0
  %150 = vmatpush1.msra.mxu0 0.0
  %151 = vmatprep.subr.mxu0 0.0
  %152 = vmatpush1.msra.mxu0 0.0
  %153 = vmatprep.subr.mxu0 0.0
  %154 = vmatpush1.msra.mxu0 0.0
  %155 = vmatprep.subr.mxu0 0.0
  %156 = vmatpush1.msra.mxu0 0.0
  %157 = vmatprep.subr.mxu0 0.0
  %158 = vmatpush1.msra.mxu0 0.0
  %159 = vmatprep.subr.mxu0 0.0
  %160 = vmatpush1.msra.mxu0 0.0
  %161 = vmatprep.subr.mxu0 0.0
  %162 = vmatpush1.msra.mxu0 0.0
  %163 = vmatprep.subr.mxu0 0.0
  %164 = vmatpush1.msra.mxu0 0.0
  %165 = vmatprep.subr.mxu0 0.0
  %166 = vmatpush1.msra.mxu0 0.0
  %167 = vmatprep.subr.mxu0 0.0
  %168 = vmatpush1.msra.mxu0 0.0
  %169 = vmatprep.subr.mxu0 0.0
  %170 = vmatpush1.msra.mxu0 0.0
  %171 = vmatprep.subr.mxu0 0.0
  %172 = vmatpush1.msra.mxu0 0.0
  %173 = vmatprep.subr.mxu0 0.0
  %174 = vmatpush1.msra.mxu0 0.0
  %175 = vmatprep.subr.mxu0 0.0
  %176 = vmatpush1.msra.mxu0 0.0
  %177 = vmatprep.subr.mxu0 0.0
  %178 = vmatpush1.msra.mxu0 0.0
  %179 = vmatprep.subr.mxu0 0.0
  %180 = vmatpush1.msra.mxu0 0.0
  %181 = vmatprep.subr.mxu0 0.0
  %182 = vmatpush1.msra.mxu0 0.0
  %183 = vmatprep.subr.mxu0 0.0
  %184 = vmatpush1.msra.mxu0 0.0
  %185 = vmatprep.subr.mxu0 0.0
  %186 = vmatpush1.msra.mxu0 0.0
  %187 = vmatprep.subr.mxu0 0.0
  %188 = vmatpush1.msra.mxu0 0.0
  %189 = vmatprep.subr.mxu0 0.0
  %190 = vmatpush1.msra.mxu0 0.0
  %191 = vmatprep.subr.mxu0 0.0
  %192 = vmatpush1.msra.mxu0 0.0
  %193 = vmatprep.subr.mxu0 0.0
  %194 = vmatpush1.msra.mxu0 0.0
  %195 = vmatprep.subr.mxu0 0.0
  %196 = vmatpush1.msra.mxu0 0.0
  %197 = vmatprep.subr.mxu0 0.0
  %198 = vmatpush1.msra.mxu0 0.0
  %199 = vmatprep.subr.mxu0 0.0
  %200 = vmatpush1.msra.mxu0 0.0
  %201 = vmatprep.mubr.f32.mxu0 0.0
  %202 = vmatmul.mubr.f32.gmra.mrb[0].mxu0 %v135
  %v203 = vpop.f32.mrb[0].mxu0
  %v204 = vadd.f32 %v132, %v203
  %v205 = vpop.f32.mrb[0].mxu0
  %206 = vdwg.mxu0
  %v207 = vmax.f32 %v204, 0.0
  %vm208 = vcmp.ne.f32.partialorder %v204, %v204
  %v209 = vadd.f32 %v204, 0.0
  %v210 = vand.u32 2147483647, %v204
  %v211 = vsub.f32 0.0, %v210
  %v212 = vmul.f32 %v211, 1.442695
  %v213 = vpow.pop %v212
  %v214 = vadd.f32 %v213, 1.0
  %v215 = vlog2.pop %v214
  %v216 = vmul.f32 %v215, 0.6931472
  %v217 = vmul.f32 -0.5, %v213
  %v218 = vadd.f32 %v217, 1.0
  %v219 = vmul.f32 %v218, %v213
  %v220 = vand.u32 2147483647, %v213
  %vm221 = vcmp.lt.f32.partialorder %v220, 0.0004427343
  %v222 = vsel %vm221, %v219, %v216
  %v223 = vadd.f32 %v207, %v222
  %v224 = vsel %vm208, %v209, %v223
  %v225 = vlaneseq
  %v226 = vshrl.u32 %v225, 7
  %v227 = vsub.s32 2, %v226
  %v228 = vrot.slane %v39, %v227
  %v230 = vsel %vm54, %v41, 0
  %v233 = vsel %vm54, %v42, 0
  %v236 = vsel %vm54, %v43, 0
  %v239 = vsel %vm54, %v44, 0
  %v242 = vsel %vm54, %v45, 0
  %v245 = vsel %vm54, %v46, 0
  %v248 = vsel %vm54, %v47, 0
  %v251 = vsel %vm54, %v48, 0
  %253 = vmatprep.subr.mxu0 0.0
  %254 = vmatpush1.msra.mxu0 %v20
  %255 = vmatprep.subr.mxu0 0.0
  %256 = vmatpush1.msra.mxu0 %v21
  %257 = vmatprep.subr.mxu0 0.0
  %258 = vmatpush1.msra.mxu0 0.0
  %259 = vmatprep.subr.mxu0 0.0
  %260 = vmatpush1.msra.mxu0 0.0
  %261 = vmatprep.subr.mxu0 0.0
  %262 = vmatpush1.msra.mxu0 0.0
  %263 = vmatprep.subr.mxu0 0.0
  %264 = vmatpush1.msra.mxu0 0.0
  %265 = vmatprep.subr.mxu0 0.0
  %266 = vmatpush1.msra.mxu0 0.0
  %267 = vmatprep.subr.mxu0 0.0
  %268 = vmatpush1.msra.mxu0 0.0
  %269 = vmatprep.subr.mxu0 0.0
  %270 = vmatpush1.msra.mxu0 0.0
  %271 = vmatprep.subr.mxu0 0.0
  %272 = vmatpush1.msra.mxu0 0.0
  %273 = vmatprep.subr.mxu0 0.0
  %274 = vmatpush1.msra.mxu0 0.0
  %275 = vmatprep.subr.mxu0 0.0
  %276 = vmatpush1.msra.mxu0 0.0
  %277 = vmatprep.subr.mxu0 0.0
  %278 = vmatpush1.msra.mxu0 0.0
  %279 = vmatprep.subr.mxu0 0.0
  %280 = vmatpush1.msra.mxu0 0.0
  %281 = vmatprep.subr.mxu0 0.0
  %282 = vmatpush1.msra.mxu0 0.0
  %283 = vmatprep.subr.mxu0 0.0
  %284 = vmatpush1.msra.mxu0 0.0
  %285 = vmatprep.subr.mxu0 0.0
  %286 = vmatpush1.msra.mxu0 0.0
  %287 = vmatprep.subr.mxu0 0.0
  %288 = vmatpush1.msra.mxu0 0.0
  %289 = vmatprep.subr.mxu0 0.0
  %290 = vmatpush1.msra.mxu0 0.0
  %291 = vmatprep.subr.mxu0 0.0
  %292 = vmatpush1.msra.mxu0 0.0
  %293 = vmatprep.subr.mxu0 0.0
  %294 = vmatpush1.msra.mxu0 0.0
  %295 = vmatprep.subr.mxu0 0.0
  %296 = vmatpush1.msra.mxu0 0.0
  %297 = vmatprep.subr.mxu0 0.0
  %298 = vmatpush1.msra.mxu0 0.0
  %299 = vmatprep.subr.mxu0 0.0
  %300 = vmatpush1.msra.mxu0 0.0
  %301 = vmatprep.subr.mxu0 0.0
  %302 = vmatpush1.msra.mxu0 0.0
  %303 = vmatprep.subr.mxu0 0.0
  %304 = vmatpush1.msra.mxu0 0.0
  %305 = vmatprep.subr.mxu0 0.0
  %306 = vmatpush1.msra.mxu0 0.0
  %307 = vmatprep.subr.mxu0 0.0
  %308 = vmatpush1.msra.mxu0 0.0
  %309 = vmatprep.subr.mxu0 0.0
  %310 = vmatpush1.msra.mxu0 0.0
  %311 = vmatprep.subr.mxu0 0.0
  %312 = vmatpush1.msra.mxu0 0.0
  %313 = vmatprep.subr.mxu0 0.0
  %314 = vmatpush1.msra.mxu0 0.0
  %315 = vmatprep.subr.mxu0 0.0
  %316 = vmatpush1.msra.mxu0 0.0
  %317 = vmatprep.mubr.f32.mxu0 0.0
  %318 = vmatmul.mubr.f32.gmra.mrb[0].mxu0 %v230
  %v319 = vpop.f32.mrb[0].mxu0
  %v320 = vadd.f32 %v228, %v319
  %v321 = vpop.f32.mrb[0].mxu0
  %322 = vmatprep.mubr.f32.mxu0 0.0
  %323 = vmatmul.mubr.f32.gmra.mrb[0].mxu0 %v233
  %v324 = vpop.f32.mrb[0].mxu0
  %v325 = vadd.f32 %v228, %v324
  %v326 = vpop.f32.mrb[0].mxu0
  %327 = vmatprep.mubr.f32.mxu0 0.0
  %328 = vmatmul.mubr.f32.gmra.mrb[0].mxu0 %v236
  %v329 = vpop.f32.mrb[0].mxu0
  %v330 = vadd.f32 %v228, %v329
  %v331 = vpop.f32.mrb[0].mxu0
  %332 = vmatprep.mubr.f32.mxu0 0.0
  %333 = vmatmul.mubr.f32.gmra.mrb[0].mxu0 %v239
  %v334 = vpop.f32.mrb[0].mxu0
  %v335 = vadd.f32 %v228, %v334
  %v336 = vpop.f32.mrb[0].mxu0
  %337 = vmatprep.mubr.f32.mxu0 0.0
  %338 = vmatmul.mubr.f32.gmra.mrb[0].mxu0 %v242
  %v339 = vpop.f32.mrb[0].mxu0
  %v340 = vadd.f32 %v228, %v339
  %v341 = vpop.f32.mrb[0].mxu0
  %342 = vmatprep.mubr.f32.mxu0 0.0
  %343 = vmatmul.mubr.f32.gmra.mrb[0].mxu0 %v245
  %v344 = vpop.f32.mrb[0].mxu0
  %v345 = vadd.f32 %v228, %v344
  %v346 = vpop.f32.mrb[0].mxu0
  %347 = vmatprep.mubr.f32.mxu0 0.0
  %348 = vmatmul.mubr.f32.gmra.mrb[0].mxu0 %v248
  %v349 = vpop.f32.mrb[0].mxu0
  %v350 = vadd.f32 %v228, %v349
  %v351 = vpop.f32.mrb[0].mxu0
  %352 = vmatprep.mubr.f32.mxu0 0.0
  %353 = vmatmul.mubr.f32.gmra.mrb[0].mxu0 %v251
  %v354 = vpop.f32.mrb[0].mxu0
  %v355 = vadd.f32 %v228, %v354
  %v356 = vpop.f32.mrb[0].mxu0
  %357 = vdwg.mxu0
  %v358 = vpack.c.bf16 %v23, %v22
  %v359 = vpack.c.bf16 %v25, %v24
  %v361 = vsel %vm133, 0, 0
  %363 = vmatprep.subr.bf16.mxu0 0
  %364 = vmatpush1.bf16.msra.mxu0 %v358
  %365 = vmatprep.subr.bf16.mxu0 0
  %366 = vmatpush1.bf16.msra.mxu0 %v359
  %367 = vmatprep.subr.bf16.mxu0 0
  %368 = vmatpush1.bf16.msra.mxu0 0
  %369 = vmatprep.subr.bf16.mxu0 0
  %370 = vmatpush1.bf16.msra.mxu0 0
  %371 = vmatprep.subr.bf16.mxu0 0
  %372 = vmatpush1.bf16.msra.mxu0 0
  %373 = vmatprep.subr.bf16.mxu0 0
  %374 = vmatpush1.bf16.msra.mxu0 0
  %375 = vmatprep.subr.bf16.mxu0 0
  %376 = vmatpush1.bf16.msra.mxu0 0
  %377 = vmatprep.subr.bf16.mxu0 0
  %378 = vmatpush1.bf16.msra.mxu0 0
  %379 = vmatprep.subr.bf16.mxu0 0
  %380 = vmatpush1.bf16.msra.mxu0 0
  %381 = vmatprep.subr.bf16.mxu0 0
  %382 = vmatpush1.bf16.msra.mxu0 0
  %383 = vmatprep.subr.bf16.mxu0 0
  %384 = vmatpush1.bf16.msra.mxu0 0
  %385 = vmatprep.subr.bf16.mxu0 0
  %386 = vmatpush1.bf16.msra.mxu0 0
  %387 = vmatprep.subr.bf16.mxu0 0
  %388 = vmatpush1.bf16.msra.mxu0 0
  %389 = vmatprep.subr.bf16.mxu0 0
  %390 = vmatpush1.bf16.msra.mxu0 0
  %391 = vmatprep.subr.bf16.mxu0 0
  %392 = vmatpush1.bf16.msra.mxu0 0
  %393 = vmatprep.subr.bf16.mxu0 0
  %394 = vmatpush1.bf16.msra.mxu0 0
  %395 = vmatprep.mubr.bf16.mxu0 0
  %396 = vmatmul.mubr.bf16.gmra.mrb[0].mxu0 %v361
  %v397 = vpop.f32.mrb[0].mxu0
  %v398 = vadd.f32 0.0, %v397
  %v399 = vpop.f32.mrb[0].mxu0
  %v400 = vpop.f32.mrb[0].mxu0
  %v401 = vpop.f32.mrb[0].mxu0
  %402 = vdwg.mxu0
  %v403 = vadd.f32 %v320, %v398
  %v404 = vxor.u32 %v403, 2147483648
  %v405 = vmul.f32 %v404, 1.442695
  %v406 = vpow.pop %v405
  %v407 = vadd.f32 %v406, 1.0
  %v408 = vrcp.pop %v407
  %v409 = vmul.f32 1.0, %v408
  %v410 = vtanh.pop %v403
  %v411 = vmul.f32 %v409, 0.0
  %413 = vrot.lane.b32.xlu0 %v410, 64
  %v414 = vpop.permute.xlu0 %413
  %v416 = vmul.f32 %v409, %v414
  %418 = vrot.lane.b32.xlu0 %v416, 32
  %v419 = vpop.permute.xlu0 %418
  %v421 = vadd.f32 %v411, %v419
  %v422 = vtanh.pop %v421
  %424 = vrot.lane.b32.xlu0 %v422, 64
  %v425 = vpop.permute.xlu0 %424
  %v427 = vmul.f32 %v409, %v425
  %v428 = vpack.c.bf16 %v427, %v427
  %430 = vrot.lane.b32.xlu0 %v428, 32
  %v431 = vpop.permute.xlu0 %430
  %v433 = vsel %vm133, %v431, 0
  %435 = vmatprep.subr.bf16.mxu0 0
  %436 = vmatpush1.bf16.msra.mxu0 %v358
  %437 = vmatprep.subr.bf16.mxu0 0
  %438 = vmatpush1.bf16.msra.mxu0 %v359
  %439 = vmatprep.subr.bf16.mxu0 0
  %440 = vmatpush1.bf16.msra.mxu0 0
  %441 = vmatprep.subr.bf16.mxu0 0
  %442 = vmatpush1.bf16.msra.mxu0 0
  %443 = vmatprep.subr.bf16.mxu0 0
  %444 = vmatpush1.bf16.msra.mxu0 0
  %445 = vmatprep.subr.bf16.mxu0 0
  %446 = vmatpush1.bf16.msra.mxu0 0
  %447 = vmatprep.subr.bf16.mxu0 0
  %448 = vmatpush1.bf16.msra.mxu0 0
  %449 = vmatprep.subr.bf16.mxu0 0
  %450 = vmatpush1.bf16.msra.mxu0 0
  %451 = vmatprep.subr.bf16.mxu0 0
  %452 = vmatpush1.bf16.msra.mxu0 0
  %453 = vmatprep.subr.bf16.mxu0 0
  %454 = vmatpush1.bf16.msra.mxu0 0
  %455 = vmatprep.subr.bf16.mxu0 0
  %456 = vmatpush1.bf16.msra.mxu0 0
  %457 = vmatprep.subr.bf16.mxu0 0
  %458 = vmatpush1.bf16.msra.mxu0 0
  %459 = vmatprep.subr.bf16.mxu0 0
  %460 = vmatpush1.bf16.msra.mxu0 0
  %461 = vmatprep.subr.bf16.mxu0 0
  %462 = vmatpush1.bf16.msra.mxu0 0
  %463 = vmatprep.subr.bf16.mxu0 0
  %464 = vmatpush1.bf16.msra.mxu0 0
  %465 = vmatprep.subr.bf16.mxu0 0
  %466 = vmatpush1.bf16.msra.mxu0 0
  %467 = vmatprep.mubr.bf16.mxu0 0
  %468 = vmatmul.mubr.bf16.gmra.mrb[0].mxu0 %v433
  %v469 = vpop.f32.mrb[0].mxu0
  %v470 = vadd.f32 0.0, %v469
  %v471 = vpop.f32.mrb[0].mxu0
  %v472 = vpop.f32.mrb[0].mxu0
  %v473 = vpop.f32.mrb[0].mxu0
  %474 = vdwg.mxu0
  %v475 = vadd.f32 %v325, %v470
  %v476 = vxor.u32 %v475, 2147483648
  %v477 = vmul.f32 %v476, 1.442695
  %v478 = vpow.pop %v477
  %v479 = vadd.f32 %v478, 1.0
  %v480 = vrcp.pop %v479
  %v481 = vmul.f32 1.0, %v480
  %v482 = vtanh.pop %v475
  %v483 = vmul.f32 %v481, %v421
  %485 = vrot.lane.b32.xlu0 %v482, 64
  %v486 = vpop.permute.xlu0 %485
  %v488 = vmul.f32 %v481, %v486
  %490 = vrot.lane.b32.xlu0 %v488, 32
  %v491 = vpop.permute.xlu0 %490
  %v493 = vadd.f32 %v483, %v491
  %v494 = vtanh.pop %v493
  %496 = vrot.lane.b32.xlu0 %v494, 64
  %v497 = vpop.permute.xlu0 %496
  %v499 = vmul.f32 %v481, %v497
  %v500 = vpack.c.bf16 %v499, %v499
  %502 = vrot.lane.b32.xlu0 %v500, 32
  %v503 = vpop.permute.xlu0 %502
  %v505 = vsel %vm133, %v503, 0
  %507 = vmatprep.subr.bf16.mxu0 0
  %508 = vmatpush1.bf16.msra.mxu0 %v358
  %509 = vmatprep.subr.bf16.mxu0 0
  %510 = vmatpush1.bf16.msra.mxu0 %v359
  %511 = vmatprep.subr.bf16.mxu0 0
  %512 = vmatpush1.bf16.msra.mxu0 0
  %513 = vmatprep.subr.bf16.mxu0 0
  %514 = vmatpush1.bf16.msra.mxu0 0
  %515 = vmatprep.subr.bf16.mxu0 0
  %516 = vmatpush1.bf16.msra.mxu0 0
  %517 = vmatprep.subr.bf16.mxu0 0
  %518 = vmatpush1.bf16.msra.mxu0 0
  %519 = vmatprep.subr.bf16.mxu0 0
  %520 = vmatpush1.bf16.msra.mxu0 0
  %521 = vmatprep.subr.bf16.mxu0 0
  %522 = vmatpush1.bf16.msra.mxu0 0
  %523 = vmatprep.subr.bf16.mxu0 0
  %524 = vmatpush1.bf16.msra.mxu0 0
  %525 = vmatprep.subr.bf16.mxu0 0
  %526 = vmatpush1.bf16.msra.mxu0 0
  %527 = vmatprep.subr.bf16.mxu0 0
  %528 = vmatpush1.bf16.msra.mxu0 0
  %529 = vmatprep.subr.bf16.mxu0 0
  %530 = vmatpush1.bf16.msra.mxu0 0
  %531 = vmatprep.subr.bf16.mxu0 0
  %532 = vmatpush1.bf16.msra.mxu0 0
  %533 = vmatprep.subr.bf16.mxu0 0
  %534 = vmatpush1.bf16.msra.mxu0 0
  %535 = vmatprep.subr.bf16.mxu0 0
  %536 = vmatpush1.bf16.msra.mxu0 0
  %537 = vmatprep.subr.bf16.mxu0 0
  %538 = vmatpush1.bf16.msra.mxu0 0
  %539 = vmatprep.mubr.bf16.mxu0 0
  %540 = vmatmul.mubr.bf16.gmra.mrb[0].mxu0 %v505
  %v541 = vpop.f32.mrb[0].mxu0
  %v542 = vadd.f32 0.0, %v541
  %v543 = vpop.f32.mrb[0].mxu0
  %v544 = vpop.f32.mrb[0].mxu0
  %v545 = vpop.f32.mrb[0].mxu0
  %546 = vdwg.mxu0
  %v547 = vadd.f32 %v330, %v542
  %v548 = vxor.u32 %v547, 2147483648
  %v549 = vmul.f32 %v548, 1.442695
  %v550 = vpow.pop %v549
  %v551 = vadd.f32 %v550, 1.0
  %v552 = vrcp.pop %v551
  %v553 = vmul.f32 1.0, %v552
  %v554 = vtanh.pop %v547
  %v555 = vmul.f32 %v553, %v493
  %557 = vrot.lane.b32.xlu0 %v554, 64
  %v558 = vpop.permute.xlu0 %557
  %v560 = vmul.f32 %v553, %v558
  %562 = vrot.lane.b32.xlu0 %v560, 32
  %v563 = vpop.permute.xlu0 %562
  %v565 = vadd.f32 %v555, %v563
  %v566 = vtanh.pop %v565
  %568 = vrot.lane.b32.xlu0 %v566, 64
  %v569 = vpop.permute.xlu0 %568
  %v571 = vmul.f32 %v553, %v569
  %v572 = vpack.c.bf16 %v571, %v571
  %574 = vrot.lane.b32.xlu0 %v572, 32
  %v575 = vpop.permute.xlu0 %574
  %v577 = vsel %vm133, %v575, 0
  %579 = vmatprep.subr.bf16.mxu0 0
  %580 = vmatpush1.bf16.msra.mxu0 %v358
  %581 = vmatprep.subr.bf16.mxu0 0
  %582 = vmatpush1.bf16.msra.mxu0 %v359
  %583 = vmatprep.subr.bf16.mxu0 0
  %584 = vmatpush1.bf16.msra.mxu0 0
  %585 = vmatprep.subr.bf16.mxu0 0
  %586 = vmatpush1.bf16.msra.mxu0 0
  %587 = vmatprep.subr.bf16.mxu0 0
  %588 = vmatpush1.bf16.msra.mxu0 0
  %589 = vmatprep.subr.bf16.mxu0 0
  %590 = vmatpush1.bf16.msra.mxu0 0
  %591 = vmatprep.subr.bf16.mxu0 0
  %592 = vmatpush1.bf16.msra.mxu0 0
  %593 = vmatprep.subr.bf16.mxu0 0
  %594 = vmatpush1.bf16.msra.mxu0 0
  %595 = vmatprep.subr.bf16.mxu0 0
  %596 = vmatpush1.bf16.msra.mxu0 0
  %597 = vmatprep.subr.bf16.mxu0 0
  %598 = vmatpush1.bf16.msra.mxu0 0
  %599 = vmatprep.subr.bf16.mxu0 0
  %600 = vmatpush1.bf16.msra.mxu0 0
  %601 = vmatprep.subr.bf16.mxu0 0
  %602 = vmatpush1.bf16.msra.mxu0 0
  %603 = vmatprep.subr.bf16.mxu0 0
  %604 = vmatpush1.bf16.msra.mxu0 0
  %605 = vmatprep.subr.bf16.mxu0 0
  %606 = vmatpush1.bf16.msra.mxu0 0
  %607 = vmatprep.subr.bf16.mxu0 0
  %608 = vmatpush1.bf16.msra.mxu0 0
  %609 = vmatprep.subr.bf16.mxu0 0
  %610 = vmatpush1.bf16.msra.mxu0 0
  %611 = vmatprep.mubr.bf16.mxu0 0
  %612 = vmatmul.mubr.bf16.gmra.mrb[0].mxu0 %v577
  %v613 = vpop.f32.mrb[0].mxu0
  %v614 = vadd.f32 0.0, %v613
  %v615 = vpop.f32.mrb[0].mxu0
  %v616 = vpop.f32.mrb[0].mxu0
  %v617 = vpop.f32.mrb[0].mxu0
  %618 = vdwg.mxu0
  %v619 = vadd.f32 %v335, %v614
  %v620 = vxor.u32 %v619, 2147483648
  %v621 = vmul.f32 %v620, 1.442695
  %v622 = vpow.pop %v621
  %v623 = vadd.f32 %v622, 1.0
  %v624 = vrcp.pop %v623
  %v625 = vmul.f32 1.0, %v624
  %v626 = vtanh.pop %v619
  %v627 = vmul.f32 %v625, %v565
  %629 = vrot.lane.b32.xlu0 %v626, 64
  %v630 = vpop.permute.xlu0 %629
  %v632 = vmul.f32 %v625, %v630
  %634 = vrot.lane.b32.xlu0 %v632, 32
  %v635 = vpop.permute.xlu0 %634
  %v637 = vadd.f32 %v627, %v635
  %v638 = vtanh.pop %v637
  %640 = vrot.lane.b32.xlu0 %v638, 64
  %v641 = vpop.permute.xlu0 %640
  %v643 = vmul.f32 %v625, %v641
  %v644 = vpack.c.bf16 %v643, %v643
  %646 = vrot.lane.b32.xlu0 %v644, 32
  %v647 = vpop.permute.xlu0 %646
  %v649 = vsel %vm133, %v647, 0
  %651 = vmatprep.subr.bf16.mxu0 0
  %652 = vmatpush1.bf16.msra.mxu0 %v358
  %653 = vmatprep.subr.bf16.mxu0 0
  %654 = vmatpush1.bf16.msra.mxu0 %v359
  %655 = vmatprep.subr.bf16.mxu0 0
  %656 = vmatpush1.bf16.msra.mxu0 0
  %657 = vmatprep.subr.bf16.mxu0 0
  %658 = vmatpush1.bf16.msra.mxu0 0
  %659 = vmatprep.subr.bf16.mxu0 0
  %660 = vmatpush1.bf16.msra.mxu0 0
  %661 = vmatprep.subr.bf16.mxu0 0
  %662 = vmatpush1.bf16.msra.mxu0 0
  %663 = vmatprep.subr.bf16.mxu0 0
  %664 = vmatpush1.bf16.msra.mxu0 0
  %665 = vmatprep.subr.bf16.mxu0 0
  %666 = vmatpush1.bf16.msra.mxu0 0
  %667 = vmatprep.subr.bf16.mxu0 0
  %668 = vmatpush1.bf16.msra.mxu0 0
  %669 = vmatprep.subr.bf16.mxu0 0
  %670 = vmatpush1.bf16.msra.mxu0 0
  %671 = vmatprep.subr.bf16.mxu0 0
  %672 = vmatpush1.bf16.msra.mxu0 0
  %673 = vmatprep.subr.bf16.mxu0 0
  %674 = vmatpush1.bf16.msra.mxu0 0
  %675 = vmatprep.subr.bf16.mxu0 0
  %676 = vmatpush1.bf16.msra.mxu0 0
  %677 = vmatprep.subr.bf16.mxu0 0
  %678 = vmatpush1.bf16.msra.mxu0 0
  %679 = vmatprep.subr.bf16.mxu0 0
  %680 = vmatpush1.bf16.msra.mxu0 0
  %681 = vmatprep.subr.bf16.mxu0 0
  %682 = vmatpush1.bf16.msra.mxu0 0
  %683 = vmatprep.mubr.bf16.mxu0 0
  %684 = vmatmul.mubr.bf16.gmra.mrb[0].mxu0 %v649
  %v685 = vpop.f32.mrb[0].mxu0
  %v686 = vadd.f32 0.0, %v685
  %v687 = vpop.f32.mrb[0].mxu0
  %v688 = vpop.f32.mrb[0].mxu0
  %v689 = vpop.f32.mrb[0].mxu0
  %690 = vdwg.mxu0
  %v691 = vadd.f32 %v340, %v686
  %v692 = vxor.u32 %v691, 2147483648
  %v693 = vmul.f32 %v692, 1.442695
  %v694 = vpow.pop %v693
  %v695 = vadd.f32 %v694, 1.0
  %v696 = vrcp.pop %v695
  %v697 = vmul.f32 1.0, %v696
  %v698 = vtanh.pop %v691
  %v699 = vmul.f32 %v697, %v637
  %701 = vrot.lane.b32.xlu0 %v698, 64
  %v702 = vpop.permute.xlu0 %701
  %v704 = vmul.f32 %v697, %v702
  %706 = vrot.lane.b32.xlu0 %v704, 32
  %v707 = vpop.permute.xlu0 %706
  %v709 = vadd.f32 %v699, %v707
  %v710 = vtanh.pop %v709
  %712 = vrot.lane.b32.xlu0 %v710, 64
  %v713 = vpop.permute.xlu0 %712
  %v715 = vmul.f32 %v697, %v713
  %v716 = vpack.c.bf16 %v715, %v715
  %718 = vrot.lane.b32.xlu0 %v716, 32
  %v719 = vpop.permute.xlu0 %718
  %v721 = vsel %vm133, %v719, 0
  %723 = vmatprep.subr.bf16.mxu0 0
  %724 = vmatpush1.bf16.msra.mxu0 %v358
  %725 = vmatprep.subr.bf16.mxu0 0
  %726 = vmatpush1.bf16.msra.mxu0 %v359
  %727 = vmatprep.subr.bf16.mxu0 0
  %728 = vmatpush1.bf16.msra.mxu0 0
  %729 = vmatprep.subr.bf16.mxu0 0
  %730 = vmatpush1.bf16.msra.mxu0 0
  %731 = vmatprep.subr.bf16.mxu0 0
  %732 = vmatpush1.bf16.msra.mxu0 0
  %733 = vmatprep.subr.bf16.mxu0 0
  %734 = vmatpush1.bf16.msra.mxu0 0
  %735 = vmatprep.subr.bf16.mxu0 0
  %736 = vmatpush1.bf16.msra.mxu0 0
  %737 = vmatprep.subr.bf16.mxu0 0
  %738 = vmatpush1.bf16.msra.mxu0 0
  %739 = vmatprep.subr.bf16.mxu0 0
  %740 = vmatpush1.bf16.msra.mxu0 0
  %741 = vmatprep.subr.bf16.mxu0 0
  %742 = vmatpush1.bf16.msra.mxu0 0
  %743 = vmatprep.subr.bf16.mxu0 0
  %744 = vmatpush1.bf16.msra.mxu0 0
  %745 = vmatprep.subr.bf16.mxu0 0
  %746 = vmatpush1.bf16.msra.mxu0 0
  %747 = vmatprep.subr.bf16.mxu0 0
  %748 = vmatpush1.bf16.msra.mxu0 0
  %749 = vmatprep.subr.bf16.mxu0 0
  %750 = vmatpush1.bf16.msra.mxu0 0
  %751 = vmatprep.subr.bf16.mxu0 0
  %752 = vmatpush1.bf16.msra.mxu0 0
  %753 = vmatprep.subr.bf16.mxu0 0
  %754 = vmatpush1.bf16.msra.mxu0 0
  %755 = vmatprep.mubr.bf16.mxu0 0
  %756 = vmatmul.mubr.bf16.gmra.mrb[0].mxu0 %v721
  %v757 = vpop.f32.mrb[0].mxu0
  %v758 = vadd.f32 0.0, %v757
  %v759 = vpop.f32.mrb[0].mxu0
  %v760 = vpop.f32.mrb[0].mxu0
  %v761 = vpop.f32.mrb[0].mxu0
  %762 = vdwg.mxu0
  %v763 = vadd.f32 %v345, %v758
  %v764 = vxor.u32 %v763, 2147483648
  %v765 = vmul.f32 %v764, 1.442695
  %v766 = vpow.pop %v765
  %v767 = vadd.f32 %v766, 1.0
  %v768 = vrcp.pop %v767
  %v769 = vmul.f32 1.0, %v768
  %v770 = vtanh.pop %v763
  %v771 = vmul.f32 %v769, %v709
  %773 = vrot.lane.b32.xlu0 %v770, 64
  %v774 = vpop.permute.xlu0 %773
  %v776 = vmul.f32 %v769, %v774
  %778 = vrot.lane.b32.xlu0 %v776, 32
  %v779 = vpop.permute.xlu0 %778
  %v781 = vadd.f32 %v771, %v779
  %v782 = vtanh.pop %v781
  %784 = vrot.lane.b32.xlu0 %v782, 64
  %v785 = vpop.permute.xlu0 %784
  %v787 = vmul.f32 %v769, %v785
  %v788 = vpack.c.bf16 %v787, %v787
  %790 = vrot.lane.b32.xlu0 %v788, 32
  %v791 = vpop.permute.xlu0 %790
  %v793 = vsel %vm133, %v791, 0
  %795 = vmatprep.subr.bf16.mxu0 0
  %796 = vmatpush1.bf16.msra.mxu0 %v358
  %797 = vmatprep.subr.bf16.mxu0 0
  %798 = vmatpush1.bf16.msra.mxu0 %v359
  %799 = vmatprep.subr.bf16.mxu0 0
  %800 = vmatpush1.bf16.msra.mxu0 0
  %801 = vmatprep.subr.bf16.mxu0 0
  %802 = vmatpush1.bf16.msra.mxu0 0
  %803 = vmatprep.subr.bf16.mxu0 0
  %804 = vmatpush1.bf16.msra.mxu0 0
  %805 = vmatprep.subr.bf16.mxu0 0
  %806 = vmatpush1.bf16.msra.mxu0 0
  %807 = vmatprep.subr.bf16.mxu0 0
  %808 = vmatpush1.bf16.msra.mxu0 0
  %809 = vmatprep.subr.bf16.mxu0 0
  %810 = vmatpush1.bf16.msra.mxu0 0
  %811 = vmatprep.subr.bf16.mxu0 0
  %812 = vmatpush1.bf16.msra.mxu0 0
  %813 = vmatprep.subr.bf16.mxu0 0
  %814 = vmatpush1.bf16.msra.mxu0 0
  %815 = vmatprep.subr.bf16.mxu0 0
  %816 = vmatpush1.bf16.msra.mxu0 0
  %817 = vmatprep.subr.bf16.mxu0 0
  %818 = vmatpush1.bf16.msra.mxu0 0
  %819 = vmatprep.subr.bf16.mxu0 0
  %820 = vmatpush1.bf16.msra.mxu0 0
  %821 = vmatprep.subr.bf16.mxu0 0
  %822 = vmatpush1.bf16.msra.mxu0 0
  %823 = vmatprep.subr.bf16.mxu0 0
  %824 = vmatpush1.bf16.msra.mxu0 0
  %825 = vmatprep.subr.bf16.mxu0 0
  %826 = vmatpush1.bf16.msra.mxu0 0
  %827 = vmatprep.mubr.bf16.mxu0 0
  %828 = vmatmul.mubr.bf16.gmra.mrb[0].mxu0 %v793
  %v829 = vpop.f32.mrb[0].mxu0
  %v830 = vadd.f32 0.0, %v829
  %v831 = vpop.f32.mrb[0].mxu0
  %v832 = vpop.f32.mrb[0].mxu0
  %v833 = vpop.f32.mrb[0].mxu0
  %834 = vdwg.mxu0
  %v835 = vadd.f32 %v350, %v830
  %v836 = vxor.u32 %v835, 2147483648
  %v837 = vmul.f32 %v836, 1.442695
  %v838 = vpow.pop %v837
  %v839 = vadd.f32 %v838, 1.0
  %v840 = vrcp.pop %v839
  %v841 = vmul.f32 1.0, %v840
  %v842 = vtanh.pop %v835
  %v843 = vmul.f32 %v841, %v781
  %845 = vrot.lane.b32.xlu0 %v842, 64
  %v846 = vpop.permute.xlu0 %845
  %v848 = vmul.f32 %v841, %v846
  %850 = vrot.lane.b32.xlu0 %v848, 32
  %v851 = vpop.permute.xlu0 %850
  %v853 = vadd.f32 %v843, %v851
  %v854 = vtanh.pop %v853
  %856 = vrot.lane.b32.xlu0 %v854, 64
  %v857 = vpop.permute.xlu0 %856
  %v859 = vmul.f32 %v841, %v857
  %v860 = vpack.c.bf16 %v859, %v859
  %862 = vrot.lane.b32.xlu0 %v860, 32
  %v863 = vpop.permute.xlu0 %862
  %v865 = vsel %vm133, %v863, 0
  %867 = vmatprep.subr.bf16.mxu0 0
  %868 = vmatpush1.bf16.msra.mxu0 %v358
  %869 = vmatprep.subr.bf16.mxu0 0
  %870 = vmatpush1.bf16.msra.mxu0 %v359
  %871 = vmatprep.subr.bf16.mxu0 0
  %872 = vmatpush1.bf16.msra.mxu0 0
  %873 = vmatprep.subr.bf16.mxu0 0
  %874 = vmatpush1.bf16.msra.mxu0 0
  %875 = vmatprep.subr.bf16.mxu0 0
  %876 = vmatpush1.bf16.msra.mxu0 0
  %877 = vmatprep.subr.bf16.mxu0 0
  %878 = vmatpush1.bf16.msra.mxu0 0
  %879 = vmatprep.subr.bf16.mxu0 0
  %880 = vmatpush1.bf16.msra.mxu0 0
  %881 = vmatprep.subr.bf16.mxu0 0
  %882 = vmatpush1.bf16.msra.mxu0 0
  %883 = vmatprep.subr.bf16.mxu0 0
  %884 = vmatpush1.bf16.msra.mxu0 0
  %885 = vmatprep.subr.bf16.mxu0 0
  %886 = vmatpush1.bf16.msra.mxu0 0
  %887 = vmatprep.subr.bf16.mxu0 0
  %888 = vmatpush1.bf16.msra.mxu0 0
  %889 = vmatprep.subr.bf16.mxu0 0
  %890 = vmatpush1.bf16.msra.mxu0 0
  %891 = vmatprep.subr.bf16.mxu0 0
  %892 = vmatpush1.bf16.msra.mxu0 0
  %893 = vmatprep.subr.bf16.mxu0 0
  %894 = vmatpush1.bf16.msra.mxu0 0
  %895 = vmatprep.subr.bf16.mxu0 0
  %896 = vmatpush1.bf16.msra.mxu0 0
  %897 = vmatprep.subr.bf16.mxu0 0
  %898 = vmatpush1.bf16.msra.mxu0 0
  %899 = vmatprep.mubr.bf16.mxu0 0
  %900 = vmatmul.mubr.bf16.gmra.mrb[0].mxu0 %v865
  %v901 = vpop.f32.mrb[0].mxu0
  %v902 = vadd.f32 0.0, %v901
  %v903 = vpop.f32.mrb[0].mxu0
  %v904 = vpop.f32.mrb[0].mxu0
  %v905 = vpop.f32.mrb[0].mxu0
  %906 = vdwg.mxu0
  %v907 = vadd.f32 %v355, %v902
  %v908 = vxor.u32 %v907, 2147483648
  %v909 = vmul.f32 %v908, 1.442695
  %v910 = vpow.pop %v909
  %v911 = vadd.f32 %v910, 1.0
  %v912 = vrcp.pop %v911
  %v913 = vmul.f32 1.0, %v912
  %v914 = vtanh.pop %v907
  %v915 = vmul.f32 %v913, %v853
  %917 = vrot.lane.b32.xlu0 %v914, 64
  %v918 = vpop.permute.xlu0 %917
  %v920 = vmul.f32 %v913, %v918
  %922 = vrot.lane.b32.xlu0 %v920, 32
  %v923 = vpop.permute.xlu0 %922
  %v925 = vadd.f32 %v915, %v923
  %v926 = vtanh.pop %v925
  %928 = vrot.lane.b32.xlu0 %v926, 64
  %v929 = vpop.permute.xlu0 %928
  %v931 = vmul.f32 %v913, %v929
  %v932 = vlaneseq
  %v933 = vshrl.u32 %v932, 7
  %v934 = vsub.s32 3, %v933
  %v935 = vrot.slane %v39, %v934
  %937 = vrot.lane.b32.xlu0 %v931, 32
  %v938 = vpop.permute.xlu0 %937
  %v939 = vsel %vm133, %v938, 0
  %941 = vmatprep.subr.mxu0 0.0
  %942 = vmatpush1.msra.mxu0 %v26
  %943 = vmatprep.subr.mxu0 0.0
  %944 = vmatpush1.msra.mxu0 %v27
  %945 = vmatprep.subr.mxu0 0.0
  %946 = vmatpush1.msra.mxu0 %v28
  %947 = vmatprep.subr.mxu0 0.0
  %948 = vmatpush1.msra.mxu0 %v29
  %949 = vmatprep.subr.mxu0 0.0
  %950 = vmatpush1.msra.mxu0 0.0
  %951 = vmatprep.subr.mxu0 0.0
  %952 = vmatpush1.msra.mxu0 0.0
  %953 = vmatprep.subr.mxu0 0.0
  %954 = vmatpush1.msra.mxu0 0.0
  %955 = vmatprep.subr.mxu0 0.0
  %956 = vmatpush1.msra.mxu0 0.0
  %957 = vmatprep.subr.mxu0 0.0
  %958 = vmatpush1.msra.mxu0 0.0
  %959 = vmatprep.subr.mxu0 0.0
  %960 = vmatpush1.msra.mxu0 0.0
  %961 = vmatprep.subr.mxu0 0.0
  %962 = vmatpush1.msra.mxu0 0.0
  %963 = vmatprep.subr.mxu0 0.0
  %964 = vmatpush1.msra.mxu0 0.0
  %965 = vmatprep.subr.mxu0 0.0
  %966 = vmatpush1.msra.mxu0 0.0
  %967 = vmatprep.subr.mxu0 0.0
  %968 = vmatpush1.msra.mxu0 0.0
  %969 = vmatprep.subr.mxu0 0.0
  %970 = vmatpush1.msra.mxu0 0.0
  %971 = vmatprep.subr.mxu0 0.0
  %972 = vmatpush1.msra.mxu0 0.0
  %973 = vmatprep.subr.mxu0 0.0
  %974 = vmatpush1.msra.mxu0 0.0
  %975 = vmatprep.subr.mxu0 0.0
  %976 = vmatpush1.msra.mxu0 0.0
  %977 = vmatprep.subr.mxu0 0.0
  %978 = vmatpush1.msra.mxu0 0.0
  %979 = vmatprep.subr.mxu0 0.0
  %980 = vmatpush1.msra.mxu0 0.0
  %981 = vmatprep.subr.mxu0 0.0
  %982 = vmatpush1.msra.mxu0 0.0
  %983 = vmatprep.subr.mxu0 0.0
  %984 = vmatpush1.msra.mxu0 0.0
  %985 = vmatprep.subr.mxu0 0.0
  %986 = vmatpush1.msra.mxu0 0.0
  %987 = vmatprep.subr.mxu0 0.0
  %988 = vmatpush1.msra.mxu0 0.0
  %989 = vmatprep.subr.mxu0 0.0
  %990 = vmatpush1.msra.mxu0 0.0
  %991 = vmatprep.subr.mxu0 0.0
  %992 = vmatpush1.msra.mxu0 0.0
  %993 = vmatprep.subr.mxu0 0.0
  %994 = vmatpush1.msra.mxu0 0.0
  %995 = vmatprep.subr.mxu0 0.0
  %996 = vmatpush1.msra.mxu0 0.0
  %997 = vmatprep.subr.mxu0 0.0
  %998 = vmatpush1.msra.mxu0 0.0
  %999 = vmatprep.subr.mxu0 0.0
  %1000 = vmatpush1.msra.mxu0 0.0
  %1001 = vmatprep.subr.mxu0 0.0
  %1002 = vmatpush1.msra.mxu0 0.0
  %1003 = vmatprep.subr.mxu0 0.0
  %1004 = vmatpush1.msra.mxu0 0.0
  %1005 = vmatprep.mubr.f32.mxu0 0.0
  %1006 = vmatmul.mubr.f32.gmra.mrb[0].mxu0 %v939
  %v1007 = vpop.f32.mrb[0].mxu0
  %v1008 = vadd.f32 %v935, %v1007
  %v1009 = vpop.f32.mrb[0].mxu0
  %1010 = vdwg.mxu0
  %v1011 = vmax.f32 %v1008, 0.0
  %vm1012 = vcmp.ne.f32.partialorder %v1008, %v1008
  %v1013 = vadd.f32 %v1008, 0.0
  %v1014 = vand.u32 2147483647, %v1008
  %v1015 = vsub.f32 0.0, %v1014
  %v1016 = vmul.f32 %v1015, 1.442695
  %v1017 = vpow.pop %v1016
  %v1018 = vadd.f32 %v1017, 1.0
  %v1019 = vlog2.pop %v1018
  %v1020 = vmul.f32 %v1019, 0.6931472
  %v1021 = vmul.f32 -0.5, %v1017
  %v1022 = vadd.f32 %v1021, 1.0
  %v1023 = vmul.f32 %v1022, %v1017
  %v1024 = vand.u32 2147483647, %v1017
  %vm1025 = vcmp.lt.f32.partialorder %v1024, 0.0004427343
  %v1026 = vsel %vm1025, %v1023, %v1020
  %v1027 = vadd.f32 %v1011, %v1026
  %v1028 = vsel %vm1012, %v1013, %v1027
  %1030 = vrot.lane.b32.xlu0 %v49, 4
  %v1031 = vpop.permute.xlu0 %1030
  %v1033 = vmul.f32 %v1028, %v1031
  %1035 = vrot.lane.b32.xlu0 %v1033, 124
  %v1036 = vpop.permute.xlu0 %1035
  %v1038 = vadd.f32 %v1008, %v1036
  %v1039 = vlaneseq
  %v1040 = vshrl.u32 %v1039, 7
  %v1041 = vsub.s32 4, %v1040
  %v1042 = vrot.slane %v39, %v1041
  %vm1043 = vcmask 31744
  %v1045 = vsel %vm1043, %v1038, 0
  %vm1047 = vcmask 1043456
  %v1049 = vsel %vm1047, %v30, 0
  %1051 = vmatprep.subr.mxu0 0.0
  %1052 = vmatpush1.msra.mxu0 %v1049
  %1053 = vmatprep.subr.mxu0 0.0
  %1054 = vmatpush1.msra.mxu0 0.0
  %1055 = vmatprep.subr.mxu0 0.0
  %1056 = vmatpush1.msra.mxu0 0.0
  %1057 = vmatprep.subr.mxu0 0.0
  %1058 = vmatpush1.msra.mxu0 0.0
  %1059 = vmatprep.subr.mxu0 0.0
  %1060 = vmatpush1.msra.mxu0 0.0
  %1061 = vmatprep.subr.mxu0 0.0
  %1062 = vmatpush1.msra.mxu0 0.0
  %1063 = vmatprep.subr.mxu0 0.0
  %1064 = vmatpush1.msra.mxu0 0.0
  %1065 = vmatprep.subr.mxu0 0.0
  %1066 = vmatpush1.msra.mxu0 0.0
  %1067 = vmatprep.subr.mxu0 0.0
  %1068 = vmatpush1.msra.mxu0 0.0
  %1069 = vmatprep.subr.mxu0 0.0
  %1070 = vmatpush1.msra.mxu0 0.0
  %1071 = vmatprep.subr.mxu0 0.0
  %1072 = vmatpush1.msra.mxu0 0.0
  %1073 = vmatprep.subr.mxu0 0.0
  %1074 = vmatpush1.msra.mxu0 0.0
  %1075 = vmatprep.subr.mxu0 0.0
  %1076 = vmatpush1.msra.mxu0 0.0
  %1077 = vmatprep.subr.mxu0 0.0
  %1078 = vmatpush1.msra.mxu0 0.0
  %1079 = vmatprep.subr.mxu0 0.0
  %1080 = vmatpush1.msra.mxu0 0.0
  %1081 = vmatprep.subr.mxu0 0.0
  %1082 = vmatpush1.msra.mxu0 0.0
  %1083 = vmatprep.subr.mxu0 0.0
  %1084 = vmatpush1.msra.mxu0 0.0
  %1085 = vmatprep.subr.mxu0 0.0
  %1086 = vmatpush1.msra.mxu0 0.0
  %1087 = vmatprep.subr.mxu0 0.0
  %1088 = vmatpush1.msra.mxu0 0.0
  %1089 = vmatprep.subr.mxu0 0.0
  %1090 = vmatpush1.msra.mxu0 0.0
  %1091 = vmatprep.subr.mxu0 0.0
  %1092 = vmatpush1.msra.mxu0 0.0
  %1093 = vmatprep.subr.mxu0 0.0
  %1094 = vmatpush1.msra.mxu0 0.0
  %1095 = vmatprep.subr.mxu0 0.0
  %1096 = vmatpush1.msra.mxu0 0.0
  %1097 = vmatprep.subr.mxu0 0.0
  %1098 = vmatpush1.msra.mxu0 0.0
  %1099 = vmatprep.subr.mxu0 0.0
  %1100 = vmatpush1.msra.mxu0 0.0
  %1101 = vmatprep.subr.mxu0 0.0
  %1102 = vmatpush1.msra.mxu0 0.0
  %1103 = vmatprep.subr.mxu0 0.0
  %1104 = vmatpush1.msra.mxu0 0.0
  %1105 = vmatprep.subr.mxu0 0.0
  %1106 = vmatpush1.msra.mxu0 0.0
  %1107 = vmatprep.subr.mxu0 0.0
  %1108 = vmatpush1.msra.mxu0 0.0
  %1109 = vmatprep.subr.mxu0 0.0
  %1110 = vmatpush1.msra.mxu0 0.0
  %1111 = vmatprep.subr.mxu0 0.0
  %1112 = vmatpush1.msra.mxu0 0.0
  %1113 = vmatprep.subr.mxu0 0.0
  %1114 = vmatpush1.msra.mxu0 0.0
  %1115 = vmatprep.mubr.f32.mxu0 0.0
  %1116 = vmatmul.mubr.f32.gmra.mrb[0].mxu0 %v1045
  %v1117 = vpop.f32.mrb[0].mxu0
  %v1118 = vadd.f32 %v1042, %v1117
  %v1119 = vpop.f32.mrb[0].mxu0
  %1120 = vdwg.mxu0
  %v1121 = vpack.c.bf16 %v32, %v31
  %v1122 = vpack.c.bf16 %v34, %v33
  %1123 = vmatprep.subr.bf16.mxu0 0
  %1124 = vmatpush1.bf16.msra.mxu0 %v1121
  %1125 = vmatprep.subr.bf16.mxu0 0
  %1126 = vmatpush1.bf16.msra.mxu0 %v1122
  %1127 = vmatprep.subr.bf16.mxu0 0
  %1128 = vmatpush1.bf16.msra.mxu0 0
  %1129 = vmatprep.subr.bf16.mxu0 0
  %1130 = vmatpush1.bf16.msra.mxu0 0
  %1131 = vmatprep.subr.bf16.mxu0 0
  %1132 = vmatpush1.bf16.msra.mxu0 0
  %1133 = vmatprep.subr.bf16.mxu0 0
  %1134 = vmatpush1.bf16.msra.mxu0 0
  %1135 = vmatprep.subr.bf16.mxu0 0
  %1136 = vmatpush1.bf16.msra.mxu0 0
  %1137 = vmatprep.subr.bf16.mxu0 0
  %1138 = vmatpush1.bf16.msra.mxu0 0
  %1139 = vmatprep.subr.bf16.mxu0 0
  %1140 = vmatpush1.bf16.msra.mxu0 0
  %1141 = vmatprep.subr.bf16.mxu0 0
  %1142 = vmatpush1.bf16.msra.mxu0 0
  %1143 = vmatprep.subr.bf16.mxu0 0
  %1144 = vmatpush1.bf16.msra.mxu0 0
  %1145 = vmatprep.subr.bf16.mxu0 0
  %1146 = vmatpush1.bf16.msra.mxu0 0
  %1147 = vmatprep.subr.bf16.mxu0 0
  %1148 = vmatpush1.bf16.msra.mxu0 0
  %1149 = vmatprep.subr.bf16.mxu0 0
  %1150 = vmatpush1.bf16.msra.mxu0 0
  %1151 = vmatprep.subr.bf16.mxu0 0
  %1152 = vmatpush1.bf16.msra.mxu0 0
  %1153 = vmatprep.subr.bf16.mxu0 0
  %1154 = vmatpush1.bf16.msra.mxu0 0
  %1155 = vmatprep.mubr.bf16.mxu0 0
  %1156 = vmatmul.mubr.bf16.gmra.mrb[0].mxu0 %v361
  %v1157 = vpop.f32.mrb[0].mxu0
  %v1158 = vadd.f32 0.0, %v1157
  %v1159 = vpop.f32.mrb[0].mxu0
  %v1160 = vpop.f32.mrb[0].mxu0
  %v1161 = vpop.f32.mrb[0].mxu0
  %1162 = vdwg.mxu0
  %v1163 = vadd.f32 %v1118, %v1158
  %v1164 = vxor.u32 %v1163, 2147483648
  %v1165 = vmul.f32 %v1164, 1.442695
  %v1166 = vpow.pop %v1165
  %v1167 = vadd.f32 %v1166, 1.0
  %v1168 = vrcp.pop %v1167
  %v1169 = vmul.f32 1.0, %v1168
  %v1170 = vtanh.pop %v1163
  %v1171 = vmul.f32 %v1169, 0.0
  %1173 = vrot.lane.b32.xlu0 %v1170, 64
  %v1174 = vpop.permute.xlu0 %1173
  %v1176 = vmul.f32 %v1169, %v1174
  %1178 = vrot.lane.b32.xlu0 %v1176, 32
  %v1179 = vpop.permute.xlu0 %1178
  %v1181 = vadd.f32 %v1171, %v1179
  %v1182 = vtanh.pop %v1181
  %1184 = vrot.lane.b32.xlu0 %v1182, 64
  %v1185 = vpop.permute.xlu0 %1184
  %v1187 = vmul.f32 %v1169, %v1185
  %v1188 = vpack.c.bf16 %v1187, %v1187
  %1190 = vrot.lane.b32.xlu0 %v1188, 32
  %v1191 = vpop.permute.xlu0 %1190
  %v1193 = vsel %vm133, %v1191, 0
  %1195 = vmatprep.subr.bf16.mxu0 0
  %1196 = vmatpush1.bf16.msra.mxu0 %v1121
  %1197 = vmatprep.subr.bf16.mxu0 0
  %1198 = vmatpush1.bf16.msra.mxu0 %v1122
  %1199 = vmatprep.subr.bf16.mxu0 0
  %1200 = vmatpush1.bf16.msra.mxu0 0
  %1201 = vmatprep.subr.bf16.mxu0 0
  %1202 = vmatpush1.bf16.msra.mxu0 0
  %1203 = vmatprep.subr.bf16.mxu0 0
  %1204 = vmatpush1.bf16.msra.mxu0 0
  %1205 = vmatprep.subr.bf16.mxu0 0
  %1206 = vmatpush1.bf16.msra.mxu0 0
  %1207 = vmatprep.subr.bf16.mxu0 0
  %1208 = vmatpush1.bf16.msra.mxu0 0
  %1209 = vmatprep.subr.bf16.mxu0 0
  %1210 = vmatpush1.bf16.msra.mxu0 0
  %1211 = vmatprep.subr.bf16.mxu0 0
  %1212 = vmatpush1.bf16.msra.mxu0 0
  %1213 = vmatprep.subr.bf16.mxu0 0
  %1214 = vmatpush1.bf16.msra.mxu0 0
  %1215 = vmatprep.subr.bf16.mxu0 0
  %1216 = vmatpush1.bf16.msra.mxu0 0
  %1217 = vmatprep.subr.bf16.mxu0 0
  %1218 = vmatpush1.bf16.msra.mxu0 0
  %1219 = vmatprep.subr.bf16.mxu0 0
  %1220 = vmatpush1.bf16.msra.mxu0 0
  %1221 = vmatprep.subr.bf16.mxu0 0
  %1222 = vmatpush1.bf16.msra.mxu0 0
  %1223 = vmatprep.subr.bf16.mxu0 0
  %1224 = vmatpush1.bf16.msra.mxu0 0
  %1225 = vmatprep.subr.bf16.mxu0 0
  %1226 = vmatpush1.bf16.msra.mxu0 0
  %1227 = vmatprep.mubr.bf16.mxu0 0
  %1228 = vmatmul.mubr.bf16.gmra.mrb[0].mxu0 %v1193
  %v1229 = vpop.f32.mrb[0].mxu0
  %v1230 = vadd.f32 0.0, %v1229
  %v1231 = vpop.f32.mrb[0].mxu0
  %v1232 = vpop.f32.mrb[0].mxu0
  %v1233 = vpop.f32.mrb[0].mxu0
  %1234 = vdwg.mxu0
  %v1235 = vadd.f32 %v1118, %v1230
  %v1236 = vxor.u32 %v1235, 2147483648
  %v1237 = vmul.f32 %v1236, 1.442695
  %v1238 = vpow.pop %v1237
  %v1239 = vadd.f32 %v1238, 1.0
  %v1240 = vrcp.pop %v1239
  %v1241 = vmul.f32 1.0, %v1240
  %v1242 = vtanh.pop %v1235
  %v1243 = vmul.f32 %v1241, %v1181
  %1245 = vrot.lane.b32.xlu0 %v1242, 64
  %v1246 = vpop.permute.xlu0 %1245
  %v1248 = vmul.f32 %v1241, %v1246
  %1250 = vrot.lane.b32.xlu0 %v1248, 32
  %v1251 = vpop.permute.xlu0 %1250
  %v1253 = vadd.f32 %v1243, %v1251
  %v1254 = vtanh.pop %v1253
  %1256 = vrot.lane.b32.xlu0 %v1254, 64
  %v1257 = vpop.permute.xlu0 %1256
  %v1259 = vmul.f32 %v1241, %v1257
  %v1260 = vpack.c.bf16 %v1259, %v1259
  %1262 = vrot.lane.b32.xlu0 %v1260, 32
  %v1263 = vpop.permute.xlu0 %1262
  %v1265 = vsel %vm133, %v1263, 0
  %1267 = vmatprep.subr.bf16.mxu0 0
  %1268 = vmatpush1.bf16.msra.mxu0 %v1121
  %1269 = vmatprep.subr.bf16.mxu0 0
  %1270 = vmatpush1.bf16.msra.mxu0 %v1122
  %1271 = vmatprep.subr.bf16.mxu0 0
  %1272 = vmatpush1.bf16.msra.mxu0 0
  %1273 = vmatprep.subr.bf16.mxu0 0
  %1274 = vmatpush1.bf16.msra.mxu0 0
  %1275 = vmatprep.subr.bf16.mxu0 0
  %1276 = vmatpush1.bf16.msra.mxu0 0
  %1277 = vmatprep.subr.bf16.mxu0 0
  %1278 = vmatpush1.bf16.msra.mxu0 0
  %1279 = vmatprep.subr.bf16.mxu0 0
  %1280 = vmatpush1.bf16.msra.mxu0 0
  %1281 = vmatprep.subr.bf16.mxu0 0
  %1282 = vmatpush1.bf16.msra.mxu0 0
  %1283 = vmatprep.subr.bf16.mxu0 0
  %1284 = vmatpush1.bf16.msra.mxu0 0
  %1285 = vmatprep.subr.bf16.mxu0 0
  %1286 = vmatpush1.bf16.msra.mxu0 0
  %1287 = vmatprep.subr.bf16.mxu0 0
  %1288 = vmatpush1.bf16.msra.mxu0 0
  %1289 = vmatprep.subr.bf16.mxu0 0
  %1290 = vmatpush1.bf16.msra.mxu0 0
  %1291 = vmatprep.subr.bf16.mxu0 0
  %1292 = vmatpush1.bf16.msra.mxu0 0
  %1293 = vmatprep.subr.bf16.mxu0 0
  %1294 = vmatpush1.bf16.msra.mxu0 0
  %1295 = vmatprep.subr.bf16.mxu0 0
  %1296 = vmatpush1.bf16.msra.mxu0 0
  %1297 = vmatprep.subr.bf16.mxu0 0
  %1298 = vmatpush1.bf16.msra.mxu0 0
  %1299 = vmatprep.mubr.bf16.mxu0 0
  %1300 = vmatmul.mubr.bf16.gmra.mrb[0].mxu0 %v1265
  %v1301 = vpop.f32.mrb[0].mxu0
  %v1302 = vadd.f32 0.0, %v1301
  %v1303 = vpop.f32.mrb[0].mxu0
  %v1304 = vpop.f32.mrb[0].mxu0
  %v1305 = vpop.f32.mrb[0].mxu0
  %1306 = vdwg.mxu0
  %v1307 = vadd.f32 %v1118, %v1302
  %v1308 = vxor.u32 %v1307, 2147483648
  %v1309 = vmul.f32 %v1308, 1.442695
  %v1310 = vpow.pop %v1309
  %v1311 = vadd.f32 %v1310, 1.0
  %v1312 = vrcp.pop %v1311
  %v1313 = vmul.f32 1.0, %v1312
  %v1314 = vtanh.pop %v1307
  %v1315 = vmul.f32 %v1313, %v1253
  %1317 = vrot.lane.b32.xlu0 %v1314, 64
  %v1318 = vpop.permute.xlu0 %1317
  %v1320 = vmul.f32 %v1313, %v1318
  %1322 = vrot.lane.b32.xlu0 %v1320, 32
  %v1323 = vpop.permute.xlu0 %1322
  %v1325 = vadd.f32 %v1315, %v1323
  %v1326 = vtanh.pop %v1325
  %1328 = vrot.lane.b32.xlu0 %v1326, 64
  %v1329 = vpop.permute.xlu0 %1328
  %v1331 = vmul.f32 %v1313, %v1329
  %v1332 = vpack.c.bf16 %v1331, %v1331
  %1334 = vrot.lane.b32.xlu0 %v1332, 32
  %v1335 = vpop.permute.xlu0 %1334
  %v1337 = vsel %vm133, %v1335, 0
  %1339 = vmatprep.subr.bf16.mxu0 0
  %1340 = vmatpush1.bf16.msra.mxu0 %v1121
  %1341 = vmatprep.subr.bf16.mxu0 0
  %1342 = vmatpush1.bf16.msra.mxu0 %v1122
  %1343 = vmatprep.subr.bf16.mxu0 0
  %1344 = vmatpush1.bf16.msra.mxu0 0
  %1345 = vmatprep.subr.bf16.mxu0 0
  %1346 = vmatpush1.bf16.msra.mxu0 0
  %1347 = vmatprep.subr.bf16.mxu0 0
  %1348 = vmatpush1.bf16.msra.mxu0 0
  %1349 = vmatprep.subr.bf16.mxu0 0
  %1350 = vmatpush1.bf16.msra.mxu0 0
  %1351 = vmatprep.subr.bf16.mxu0 0
  %1352 = vmatpush1.bf16.msra.mxu0 0
  %1353 = vmatprep.subr.bf16.mxu0 0
  %1354 = vmatpush1.bf16.msra.mxu0 0
  %1355 = vmatprep.subr.bf16.mxu0 0
  %1356 = vmatpush1.bf16.msra.mxu0 0
  %1357 = vmatprep.subr.bf16.mxu0 0
  %1358 = vmatpush1.bf16.msra.mxu0 0
  %1359 = vmatprep.subr.bf16.mxu0 0
  %1360 = vmatpush1.bf16.msra.mxu0 0
  %1361 = vmatprep.subr.bf16.mxu0 0
  %1362 = vmatpush1.bf16.msra.mxu0 0
  %1363 = vmatprep.subr.bf16.mxu0 0
  %1364 = vmatpush1.bf16.msra.mxu0 0
  %1365 = vmatprep.subr.bf16.mxu0 0
  %1366 = vmatpush1.bf16.msra.mxu0 0
  %1367 = vmatprep.subr.bf16.mxu0 0
  %1368 = vmatpush1.bf16.msra.mxu0 0
  %1369 = vmatprep.subr.bf16.mxu0 0
  %1370 = vmatpush1.bf16.msra.mxu0 0
  %1371 = vmatprep.mubr.bf16.mxu0 0
  %1372 = vmatmul.mubr.bf16.gmra.mrb[0].mxu0 %v1337
  %v1373 = vpop.f32.mrb[0].mxu0
  %v1374 = vadd.f32 0.0, %v1373
  %v1375 = vpop.f32.mrb[0].mxu0
  %v1376 = vpop.f32.mrb[0].mxu0
  %v1377 = vpop.f32.mrb[0].mxu0
  %1378 = vdwg.mxu0
  %v1379 = vadd.f32 %v1118, %v1374
  %v1380 = vxor.u32 %v1379, 2147483648
  %v1381 = vmul.f32 %v1380, 1.442695
  %v1382 = vpow.pop %v1381
  %v1383 = vadd.f32 %v1382, 1.0
  %v1384 = vrcp.pop %v1383
  %v1385 = vmul.f32 1.0, %v1384
  %v1386 = vtanh.pop %v1379
  %v1387 = vmul.f32 %v1385, %v1325
  %1389 = vrot.lane.b32.xlu0 %v1386, 64
  %v1390 = vpop.permute.xlu0 %1389
  %v1392 = vmul.f32 %v1385, %v1390
  %1394 = vrot.lane.b32.xlu0 %v1392, 32
  %v1395 = vpop.permute.xlu0 %1394
  %v1397 = vadd.f32 %v1387, %v1395
  %v1398 = vtanh.pop %v1397
  %1400 = vrot.lane.b32.xlu0 %v1398, 64
  %v1401 = vpop.permute.xlu0 %1400
  %v1403 = vmul.f32 %v1385, %v1401
  %v1404 = vpack.c.bf16 %v1403, %v1403
  %1406 = vrot.lane.b32.xlu0 %v1404, 32
  %v1407 = vpop.permute.xlu0 %1406
  %v1409 = vsel %vm133, %v1407, 0
  %1411 = vmatprep.subr.bf16.mxu0 0
  %1412 = vmatpush1.bf16.msra.mxu0 %v1121
  %1413 = vmatprep.subr.bf16.mxu0 0
  %1414 = vmatpush1.bf16.msra.mxu0 %v1122
  %1415 = vmatprep.subr.bf16.mxu0 0
  %1416 = vmatpush1.bf16.msra.mxu0 0
  %1417 = vmatprep.subr.bf16.mxu0 0
  %1418 = vmatpush1.bf16.msra.mxu0 0
  %1419 = vmatprep.subr.bf16.mxu0 0
  %1420 = vmatpush1.bf16.msra.mxu0 0
  %1421 = vmatprep.subr.bf16.mxu0 0
  %1422 = vmatpush1.bf16.msra.mxu0 0
  %1423 = vmatprep.subr.bf16.mxu0 0
  %1424 = vmatpush1.bf16.msra.mxu0 0
  %1425 = vmatprep.subr.bf16.mxu0 0
  %1426 = vmatpush1.bf16.msra.mxu0 0
  %1427 = vmatprep.subr.bf16.mxu0 0
  %1428 = vmatpush1.bf16.msra.mxu0 0
  %1429 = vmatprep.subr.bf16.mxu0 0
  %1430 = vmatpush1.bf16.msra.mxu0 0
  %1431 = vmatprep.subr.bf16.mxu0 0
  %1432 = vmatpush1.bf16.msra.mxu0 0
  %1433 = vmatprep.subr.bf16.mxu0 0
  %1434 = vmatpush1.bf16.msra.mxu0 0
  %1435 = vmatprep.subr.bf16.mxu0 0
  %1436 = vmatpush1.bf16.msra.mxu0 0
  %1437 = vmatprep.subr.bf16.mxu0 0
  %1438 = vmatpush1.bf16.msra.mxu0 0
  %1439 = vmatprep.subr.bf16.mxu0 0
  %1440 = vmatpush1.bf16.msra.mxu0 0
  %1441 = vmatprep.subr.bf16.mxu0 0
  %1442 = vmatpush1.bf16.msra.mxu0 0
  %1443 = vmatprep.mubr.bf16.mxu0 0
  %1444 = vmatmul.mubr.bf16.gmra.mrb[0].mxu0 %v1409
  %v1445 = vpop.f32.mrb[0].mxu0
  %v1446 = vadd.f32 0.0, %v1445
  %v1447 = vpop.f32.mrb[0].mxu0
  %v1448 = vpop.f32.mrb[0].mxu0
  %v1449 = vpop.f32.mrb[0].mxu0
  %1450 = vdwg.mxu0
  %v1451 = vadd.f32 %v1118, %v1446
  %v1452 = vxor.u32 %v1451, 2147483648
  %v1453 = vmul.f32 %v1452, 1.442695
  %v1454 = vpow.pop %v1453
  %v1455 = vadd.f32 %v1454, 1.0
  %v1456 = vrcp.pop %v1455
  %v1457 = vmul.f32 1.0, %v1456
  %v1458 = vtanh.pop %v1451
  %v1459 = vmul.f32 %v1457, %v1397
  %1461 = vrot.lane.b32.xlu0 %v1458, 64
  %v1462 = vpop.permute.xlu0 %1461
  %v1464 = vmul.f32 %v1457, %v1462
  %1466 = vrot.lane.b32.xlu0 %v1464, 32
  %v1467 = vpop.permute.xlu0 %1466
  %v1469 = vadd.f32 %v1459, %v1467
  %v1470 = vtanh.pop %v1469
  %1472 = vrot.lane.b32.xlu0 %v1470, 64
  %v1473 = vpop.permute.xlu0 %1472
  %v1475 = vmul.f32 %v1457, %v1473
  %v1476 = vpack.c.bf16 %v1475, %v1475
  %1478 = vrot.lane.b32.xlu0 %v1476, 32
  %v1479 = vpop.permute.xlu0 %1478
  %v1481 = vsel %vm133, %v1479, 0
  %1483 = vmatprep.subr.bf16.mxu0 0
  %1484 = vmatpush1.bf16.msra.mxu0 %v1121
  %1485 = vmatprep.subr.bf16.mxu0 0
  %1486 = vmatpush1.bf16.msra.mxu0 %v1122
  %1487 = vmatprep.subr.bf16.mxu0 0
  %1488 = vmatpush1.bf16.msra.mxu0 0
  %1489 = vmatprep.subr.bf16.mxu0 0
  %1490 = vmatpush1.bf16.msra.mxu0 0
  %1491 = vmatprep.subr.bf16.mxu0 0
  %1492 = vmatpush1.bf16.msra.mxu0 0
  %1493 = vmatprep.subr.bf16.mxu0 0
  %1494 = vmatpush1.bf16.msra.mxu0 0
  %1495 = vmatprep.subr.bf16.mxu0 0
  %1496 = vmatpush1.bf16.msra.mxu0 0
  %1497 = vmatprep.subr.bf16.mxu0 0
  %1498 = vmatpush1.bf16.msra.mxu0 0
  %1499 = vmatprep.subr.bf16.mxu0 0
  %1500 = vmatpush1.bf16.msra.mxu0 0
  %1501 = vmatprep.subr.bf16.mxu0 0
  %1502 = vmatpush1.bf16.msra.mxu0 0
  %1503 = vmatprep.subr.bf16.mxu0 0
  %1504 = vmatpush1.bf16.msra.mxu0 0
  %1505 = vmatprep.subr.bf16.mxu0 0
  %1506 = vmatpush1.bf16.msra.mxu0 0
  %1507 = vmatprep.subr.bf16.mxu0 0
  %1508 = vmatpush1.bf16.msra.mxu0 0
  %1509 = vmatprep.subr.bf16.mxu0 0
  %1510 = vmatpush1.bf16.msra.mxu0 0
  %1511 = vmatprep.subr.bf16.mxu0 0
  %1512 = vmatpush1.bf16.msra.mxu0 0
  %1513 = vmatprep.subr.bf16.mxu0 0
  %1514 = vmatpush1.bf16.msra.mxu0 0
  %1515 = vmatprep.mubr.bf16.mxu0 0
  %1516 = vmatmul.mubr.bf16.gmra.mrb[0].mxu0 %v1481
  %v1517 = vpop.f32.mrb[0].mxu0
  %v1518 = vadd.f32 0.0, %v1517
  %v1519 = vpop.f32.mrb[0].mxu0
  %v1520 = vpop.f32.mrb[0].mxu0
  %v1521 = vpop.f32.mrb[0].mxu0
  %1522 = vdwg.mxu0
  %v1523 = vadd.f32 %v1118, %v1518
  %v1524 = vxor.u32 %v1523, 2147483648
  %v1525 = vmul.f32 %v1524, 1.442695
  %v1526 = vpow.pop %v1525
  %v1527 = vadd.f32 %v1526, 1.0
  %v1528 = vrcp.pop %v1527
  %v1529 = vmul.f32 1.0, %v1528
  %v1530 = vtanh.pop %v1523
  %v1531 = vmul.f32 %v1529, %v1469
  %1533 = vrot.lane.b32.xlu0 %v1530, 64
  %v1534 = vpop.permute.xlu0 %1533
  %v1536 = vmul.f32 %v1529, %v1534
  %1538 = vrot.lane.b32.xlu0 %v1536, 32
  %v1539 = vpop.permute.xlu0 %1538
  %v1541 = vadd.f32 %v1531, %v1539
  %v1542 = vtanh.pop %v1541
  %1544 = vrot.lane.b32.xlu0 %v1542, 64
  %v1545 = vpop.permute.xlu0 %1544
  %v1547 = vmul.f32 %v1529, %v1545
  %v1548 = vpack.c.bf16 %v1547, %v1547
  %1550 = vrot.lane.b32.xlu0 %v1548, 32
  %v1551 = vpop.permute.xlu0 %1550
  %v1553 = vsel %vm133, %v1551, 0
  %1555 = vmatprep.subr.bf16.mxu0 0
  %1556 = vmatpush1.bf16.msra.mxu0 %v1121
  %1557 = vmatprep.subr.bf16.mxu0 0
  %1558 = vmatpush1.bf16.msra.mxu0 %v1122
  %1559 = vmatprep.subr.bf16.mxu0 0
  %1560 = vmatpush1.bf16.msra.mxu0 0
  %1561 = vmatprep.subr.bf16.mxu0 0
  %1562 = vmatpush1.bf16.msra.mxu0 0
  %1563 = vmatprep.subr.bf16.mxu0 0
  %1564 = vmatpush1.bf16.msra.mxu0 0
  %1565 = vmatprep.subr.bf16.mxu0 0
  %1566 = vmatpush1.bf16.msra.mxu0 0
  %1567 = vmatprep.subr.bf16.mxu0 0
  %1568 = vmatpush1.bf16.msra.mxu0 0
  %1569 = vmatprep.subr.bf16.mxu0 0
  %1570 = vmatpush1.bf16.msra.mxu0 0
  %1571 = vmatprep.subr.bf16.mxu0 0
  %1572 = vmatpush1.bf16.msra.mxu0 0
  %1573 = vmatprep.subr.bf16.mxu0 0
  %1574 = vmatpush1.bf16.msra.mxu0 0
  %1575 = vmatprep.subr.bf16.mxu0 0
  %1576 = vmatpush1.bf16.msra.mxu0 0
  %1577 = vmatprep.subr.bf16.mxu0 0
  %1578 = vmatpush1.bf16.msra.mxu0 0
  %1579 = vmatprep.subr.bf16.mxu0 0
  %1580 = vmatpush1.bf16.msra.mxu0 0
  %1581 = vmatprep.subr.bf16.mxu0 0
  %1582 = vmatpush1.bf16.msra.mxu0 0
  %1583 = vmatprep.subr.bf16.mxu0 0
  %1584 = vmatpush1.bf16.msra.mxu0 0
  %1585 = vmatprep.subr.bf16.mxu0 0
  %1586 = vmatpush1.bf16.msra.mxu0 0
  %1587 = vmatprep.mubr.bf16.mxu0 0
  %1588 = vmatmul.mubr.bf16.gmra.mrb[0].mxu0 %v1553
  %v1589 = vpop.f32.mrb[0].mxu0
  %v1590 = vadd.f32 0.0, %v1589
  %v1591 = vpop.f32.mrb[0].mxu0
  %v1592 = vpop.f32.mrb[0].mxu0
  %v1593 = vpop.f32.mrb[0].mxu0
  %1594 = vdwg.mxu0
  %v1595 = vadd.f32 %v1118, %v1590
  %v1596 = vxor.u32 %v1595, 2147483648
  %v1597 = vmul.f32 %v1596, 1.442695
  %v1598 = vpow.pop %v1597
  %v1599 = vadd.f32 %v1598, 1.0
  %v1600 = vrcp.pop %v1599
  %v1601 = vmul.f32 1.0, %v1600
  %v1602 = vtanh.pop %v1595
  %v1603 = vmul.f32 %v1601, %v1541
  %1605 = vrot.lane.b32.xlu0 %v1602, 64
  %v1606 = vpop.permute.xlu0 %1605
  %v1608 = vmul.f32 %v1601, %v1606
  %1610 = vrot.lane.b32.xlu0 %v1608, 32
  %v1611 = vpop.permute.xlu0 %1610
  %v1613 = vadd.f32 %v1603, %v1611
  %v1614 = vtanh.pop %v1613
  %1616 = vrot.lane.b32.xlu0 %v1614, 64
  %v1617 = vpop.permute.xlu0 %1616
  %v1619 = vmul.f32 %v1601, %v1617
  %v1620 = vpack.c.bf16 %v1619, %v1619
  %1622 = vrot.lane.b32.xlu0 %v1620, 32
  %v1623 = vpop.permute.xlu0 %1622
  %v1625 = vsel %vm133, %v1623, 0
  %1627 = vmatprep.subr.bf16.mxu0 0
  %1628 = vmatpush1.bf16.msra.mxu0 %v1121
  %1629 = vmatprep.subr.bf16.mxu0 0
  %1630 = vmatpush1.bf16.msra.mxu0 %v1122
  %1631 = vmatprep.subr.bf16.mxu0 0
  %1632 = vmatpush1.bf16.msra.mxu0 0
  %1633 = vmatprep.subr.bf16.mxu0 0
  %1634 = vmatpush1.bf16.msra.mxu0 0
  %1635 = vmatprep.subr.bf16.mxu0 0
  %1636 = vmatpush1.bf16.msra.mxu0 0
  %1637 = vmatprep.subr.bf16.mxu0 0
  %1638 = vmatpush1.bf16.msra.mxu0 0
  %1639 = vmatprep.subr.bf16.mxu0 0
  %1640 = vmatpush1.bf16.msra.mxu0 0
  %1641 = vmatprep.subr.bf16.mxu0 0
  %1642 = vmatpush1.bf16.msra.mxu0 0
  %1643 = vmatprep.subr.bf16.mxu0 0
  %1644 = vmatpush1.bf16.msra.mxu0 0
  %1645 = vmatprep.subr.bf16.mxu0 0
  %1646 = vmatpush1.bf16.msra.mxu0 0
  %1647 = vmatprep.subr.bf16.mxu0 0
  %1648 = vmatpush1.bf16.msra.mxu0 0
  %1649 = vmatprep.subr.bf16.mxu0 0
  %1650 = vmatpush1.bf16.msra.mxu0 0
  %1651 = vmatprep.subr.bf16.mxu0 0
  %1652 = vmatpush1.bf16.msra.mxu0 0
  %1653 = vmatprep.subr.bf16.mxu0 0
  %1654 = vmatpush1.bf16.msra.mxu0 0
  %1655 = vmatprep.subr.bf16.mxu0 0
  %1656 = vmatpush1.bf16.msra.mxu0 0
  %1657 = vmatprep.subr.bf16.mxu0 0
  %1658 = vmatpush1.bf16.msra.mxu0 0
  %1659 = vmatprep.mubr.bf16.mxu0 0
  %1660 = vmatmul.mubr.bf16.gmra.mrb[0].mxu0 %v1625
  %v1661 = vpop.f32.mrb[0].mxu0
  %v1662 = vadd.f32 0.0, %v1661
  %v1663 = vpop.f32.mrb[0].mxu0
  %v1664 = vpop.f32.mrb[0].mxu0
  %v1665 = vpop.f32.mrb[0].mxu0
  %1666 = vdwg.mxu0
  %v1667 = vadd.f32 %v1118, %v1662
  %v1668 = vxor.u32 %v1667, 2147483648
  %v1669 = vmul.f32 %v1668, 1.442695
  %v1670 = vpow.pop %v1669
  %v1671 = vadd.f32 %v1670, 1.0
  %v1672 = vrcp.pop %v1671
  %v1673 = vmul.f32 1.0, %v1672
  %v1674 = vtanh.pop %v1667
  %v1675 = vmul.f32 %v1673, %v1613
  %1677 = vrot.lane.b32.xlu0 %v1674, 64
  %v1678 = vpop.permute.xlu0 %1677
  %v1680 = vmul.f32 %v1673, %v1678
  %1682 = vrot.lane.b32.xlu0 %v1680, 32
  %v1683 = vpop.permute.xlu0 %1682
  %v1685 = vadd.f32 %v1675, %v1683
  %v1686 = vtanh.pop %v1685
  %1688 = vrot.lane.b32.xlu0 %v1686, 64
  %v1689 = vpop.permute.xlu0 %1688
  %v1691 = vmul.f32 %v1673, %v1689
  %v1692 = vlaneseq
  %v1693 = vshrl.u32 %v1692, 7
  %v1694 = vsub.s32 5, %v1693
  %v1695 = vrot.slane %v39, %v1694
  %1704 = vrot.lane.b32.xlu0 %v1187, 32
  %v1705 = vpop.permute.xlu0 %1704
  %1706 = vrot.lane.b32.xlu0 %v1259, 32
  %v1707 = vpop.permute.xlu0 %1706
  %1708 = vrot.lane.b32.xlu0 %v1331, 32
  %v1709 = vpop.permute.xlu0 %1708
  %1710 = vrot.lane.b32.xlu0 %v1403, 32
  %v1711 = vpop.permute.xlu0 %1710
  %1712 = vrot.lane.b32.xlu0 %v1475, 32
  %v1713 = vpop.permute.xlu0 %1712
  %1714 = vrot.lane.b32.xlu0 %v1547, 32
  %v1715 = vpop.permute.xlu0 %1714
  %1716 = vrot.lane.b32.xlu0 %v1619, 32
  %v1717 = vpop.permute.xlu0 %1716
  %1718 = vrot.lane.b32.xlu0 %v1691, 32
  %v1719 = vpop.permute.xlu0 %1718
  %v1720 = vsel %vm133, %v1705, 0
  %v1722 = vsel %vm133, %v1707, 0
  %v1724 = vsel %vm133, %v1709, 0
  %v1726 = vsel %vm133, %v1711, 0
  %v1728 = vsel %vm133, %v1713, 0
  %v1730 = vsel %vm133, %v1715, 0
  %v1732 = vsel %vm133, %v1717, 0
  %v1734 = vsel %vm133, %v1719, 0
  %1736 = vmatprep.subr.mxu0 0.0
  %1737 = vmatpush1.msra.mxu0 %v35
  %1738 = vmatprep.subr.mxu0 0.0
  %1739 = vmatpush1.msra.mxu0 %v36
  %1740 = vmatprep.subr.mxu0 0.0
  %1741 = vmatpush1.msra.mxu0 %v37
  %1742 = vmatprep.subr.mxu0 0.0
  %1743 = vmatpush1.msra.mxu0 %v38
  %1744 = vmatprep.subr.mxu0 0.0
  %1745 = vmatpush1.msra.mxu0 0.0
  %1746 = vmatprep.subr.mxu0 0.0
  %1747 = vmatpush1.msra.mxu0 0.0
  %1748 = vmatprep.subr.mxu0 0.0
  %1749 = vmatpush1.msra.mxu0 0.0
  %1750 = vmatprep.subr.mxu0 0.0
  %1751 = vmatpush1.msra.mxu0 0.0
  %1752 = vmatprep.subr.mxu0 0.0
  %1753 = vmatpush1.msra.mxu0 0.0
  %1754 = vmatprep.subr.mxu0 0.0
  %1755 = vmatpush1.msra.mxu0 0.0
  %1756 = vmatprep.subr.mxu0 0.0
  %1757 = vmatpush1.msra.mxu0 0.0
  %1758 = vmatprep.subr.mxu0 0.0
  %1759 = vmatpush1.msra.mxu0 0.0
  %1760 = vmatprep.subr.mxu0 0.0
  %1761 = vmatpush1.msra.mxu0 0.0
  %1762 = vmatprep.subr.mxu0 0.0
  %1763 = vmatpush1.msra.mxu0 0.0
  %1764 = vmatprep.subr.mxu0 0.0
  %1765 = vmatpush1.msra.mxu0 0.0
  %1766 = vmatprep.subr.mxu0 0.0
  %1767 = vmatpush1.msra.mxu0 0.0
  %1768 = vmatprep.subr.mxu0 0.0
  %1769 = vmatpush1.msra.mxu0 0.0
  %1770 = vmatprep.subr.mxu0 0.0
  %1771 = vmatpush1.msra.mxu0 0.0
  %1772 = vmatprep.subr.mxu0 0.0
  %1773 = vmatpush1.msra.mxu0 0.0
  %1774 = vmatprep.subr.mxu0 0.0
  %1775 = vmatpush1.msra.mxu0 0.0
  %1776 = vmatprep.subr.mxu0 0.0
  %1777 = vmatpush1.msra.mxu0 0.0
  %1778 = vmatprep.subr.mxu0 0.0
  %1779 = vmatpush1.msra.mxu0 0.0
  %1780 = vmatprep.subr.mxu0 0.0
  %1781 = vmatpush1.msra.mxu0 0.0
  %1782 = vmatprep.subr.mxu0 0.0
  %1783 = vmatpush1.msra.mxu0 0.0
  %1784 = vmatprep.subr.mxu0 0.0
  %1785 = vmatpush1.msra.mxu0 0.0
  %1786 = vmatprep.subr.mxu0 0.0
  %1787 = vmatpush1.msra.mxu0 0.0
  %1788 = vmatprep.subr.mxu0 0.0
  %1789 = vmatpush1.msra.mxu0 0.0
  %1790 = vmatprep.subr.mxu0 0.0
  %1791 = vmatpush1.msra.mxu0 0.0
  %1792 = vmatprep.subr.mxu0 0.0
  %1793 = vmatpush1.msra.mxu0 0.0
  %1794 = vmatprep.subr.mxu0 0.0
  %1795 = vmatpush1.msra.mxu0 0.0
  %1796 = vmatprep.subr.mxu0 0.0
  %1797 = vmatpush1.msra.mxu0 0.0
  %1798 = vmatprep.subr.mxu0 0.0
  %1799 = vmatpush1.msra.mxu0 0.0
  %1800 = vmatprep.mubr.f32.mxu0 0.0
  %1801 = vmatmul.mubr.f32.gmra.mrb[0].mxu0 %v1720
  %v1802 = vpop.f32.mrb[0].mxu0
  %v1803 = vadd.f32 %v1695, %v1802
  %v1804 = vpop.f32.mrb[0].mxu0
  %1805 = vmatprep.mubr.f32.mxu0 0.0
  %1806 = vmatmul.mubr.f32.gmra.mrb[0].mxu0 %v1722
  %v1807 = vpop.f32.mrb[0].mxu0
  %v1808 = vadd.f32 %v1695, %v1807
  %v1809 = vpop.f32.mrb[0].mxu0
  %1810 = vmatprep.mubr.f32.mxu0 0.0
  %1811 = vmatmul.mubr.f32.gmra.mrb[0].mxu0 %v1724
  %v1812 = vpop.f32.mrb[0].mxu0
  %v1813 = vadd.f32 %v1695, %v1812
  %v1814 = vpop.f32.mrb[0].mxu0
  %1815 = vmatprep.mubr.f32.mxu0 0.0
  %1816 = vmatmul.mubr.f32.gmra.mrb[0].mxu0 %v1726
  %v1817 = vpop.f32.mrb[0].mxu0
  %v1818 = vadd.f32 %v1695, %v1817
  %v1819 = vpop.f32.mrb[0].mxu0
  %1820 = vmatprep.mubr.f32.mxu0 0.0
  %1821 = vmatmul.mubr.f32.gmra.mrb[0].mxu0 %v1728
  %v1822 = vpop.f32.mrb[0].mxu0
  %v1823 = vadd.f32 %v1695, %v1822
  %v1824 = vpop.f32.mrb[0].mxu0
  %1825 = vmatprep.mubr.f32.mxu0 0.0
  %1826 = vmatmul.mubr.f32.gmra.mrb[0].mxu0 %v1730
  %v1827 = vpop.f32.mrb[0].mxu0
  %v1828 = vadd.f32 %v1695, %v1827
  %v1829 = vpop.f32.mrb[0].mxu0
  %1830 = vmatprep.mubr.f32.mxu0 0.0
  %1831 = vmatmul.mubr.f32.gmra.mrb[0].mxu0 %v1732
  %v1832 = vpop.f32.mrb[0].mxu0
  %v1833 = vadd.f32 %v1695, %v1832
  %v1834 = vpop.f32.mrb[0].mxu0
  %1835 = vmatprep.mubr.f32.mxu0 0.0
  %1836 = vmatmul.mubr.f32.gmra.mrb[0].mxu0 %v1734
  %v1837 = vpop.f32.mrb[0].mxu0
  %v1838 = vadd.f32 %v1695, %v1837
  %v1839 = vpop.f32.mrb[0].mxu0
  %1840 = vdwg.mxu0
  %v1841 = vtanh.pop %v1803
  %v1842 = vtanh.pop %v1808
  %v1843 = vtanh.pop %v1813
  %v1844 = vtanh.pop %v1818
  %v1845 = vtanh.pop %v1823
  %v1846 = vtanh.pop %v1828
  %v1847 = vtanh.pop %v1833
  %v1848 = vtanh.pop %v1838
  %1849 = vst [vmem:[%s3] sm:$0xff] %v1841
  %1850 = vst [vmem:[%s3 + $0x8] sm:$0xff] %v1842
  %1851 = vst [vmem:[%s3 + $0x10] sm:$0xff] %v1843
  %1852 = vst [vmem:[%s3 + $0x18] sm:$0xff] %v1844
  %1853 = vst [vmem:[%s3 + $0x20] sm:$0xff] %v1845
  %1854 = vst [vmem:[%s3 + $0x28] sm:$0xff] %v1846
  %1855 = vst [vmem:[%s3 + $0x30] sm:$0xff] %v1847
  %1856 = vst [vmem:[%s3 + $0x38] sm:$0xff] %v1848
  %1858 = vrot.lane.b32.xlu0 %v204, 8
  %v1859 = vpop.permute.xlu0 %1858
  %1862 = vrot.lane.b32.xlu0 %v224, 8
  %v1863 = vpop.permute.xlu0 %1862
  %1865 = vrot.lane.b32.xlu0 %v1038, 16
  %v1866 = vpop.permute.xlu0 %1865
  %v1868 = vsel %vm1043, %v1008, %v1028
  %vm1869 = vcmask 64512
  %v1870 = vsel %vm1869, %v1868, %v1859
  %vm1871 = vcmask 97280
  %v1872 = vsel %vm1871, %v1870, %v1863
  %v1873 = vsel %vm54, %v1872, %v1866
  %vm1874 = vcmask 162816
  %1875 = vst.msk [vmem:[%s2] sm:$0xff] %vm1874, %v1873
  // Predicated region
  $region10: #{skill_prior_forward.1} parent=0 // pred_check
    _
  $region11: #{skill_prior_forward.1} parent=0 // pred_check_branch
    %1877 = sbr.rel (0) target = $region13
  $region12: #{skill_prior_forward.1} parent=0 // pred_region
    _
  $region13: #{skill_prior_forward.1} parent=0 // pred_fallthru
    _
  // Predicated region
  $region14: #{skill_prior_forward.1} parent=0 // pred_check
    _
  $region15: #{skill_prior_forward.1} parent=0 // pred_check_branch
    %1879 = sbr.rel (0) target = $region17
  $region16: #{skill_prior_forward.1} parent=0 // pred_region
    _
  $region17: #{skill_prior_forward.1} parent=0 // pred_fallthru
    _
  // Predicated region
  $region18: #{skill_prior_forward.1} parent=0 // pred_check
    _
  $region19: #{skill_prior_forward.1} parent=0 // pred_check_branch
    %1881 = sbr.rel (0) target = $region21
  $region20: #{skill_prior_forward.1} parent=0 // pred_region
    _
  $region21: #{skill_prior_forward.1} parent=0 // pred_fallthru
    _
  // Predicated region
  $region22: #{skill_prior_forward.1} parent=0 // pred_check
    _
  $region23: #{skill_prior_forward.1} parent=0 // pred_check_branch
    %1883 = sbr.rel (0) target = $region25
  $region24: #{skill_prior_forward.1} parent=0 // pred_region
    _
  $region25: #{skill_prior_forward.1} parent=0 // pred_fallthru
    _

</llo_original>
